<compile_context>
chip_gen: v7x
topology: tpu7x:2x2x1
jax: 0.10.0
libtpu: 0.0.40
codegen_flags: <defaults>
</compile_context>

<pallas_src>
import functools

import jax
import jax.numpy as jnp
import numpy as np
from jax.experimental import pallas as pl
from jax.experimental.pallas import tpu as pltpu


def _round_up(a: int, b: int) -> int:
    return (a + b - 1) // b * b


def _deconv_prelu_kernel(alpha_ref, xp_ref, w_ref, b_ref, o_ref, *, TR, W):
    """One grid step: TR image rows of one image -> 4 sub-pixel GEMMs + bias + PReLU.

    alpha_ref : (1,)                    f32  -- PReLU slope (SMEM, scalar prefetch)
    xp_ref    : (TR+2, W+2, Cin)        bf16 -- zero-padded row-halo block
    w_ref     : (4, 4*Cin, Cout_pad)    bf16 -- one folded weight slab per sub-pixel
    b_ref     : (1, Cout_pad)           f32
    o_ref     : (4, TR*W, Cout_pad)     bf16 -- one slab per sub-pixel (a*2 + b)
    """
    cin = xp_ref.shape[-1]
    tm = TR * W
    alpha = alpha_ref[0]
    bvec = b_ref[...]                                            # (1, Cout_pad) f32

    # Hoist the 3 column-shifted views once per grid step (shared by all sub-pixels);
    # column offsets 1/2 are the only sublane-unaligned relayouts of the step.
    cols = [xp_ref[:, dw:dw + W, :] for dw in range(3)]          # (TR+2, W, Cin) bf16
    # 9 row/col taps, flattened to GEMM-row-major once each.
    taps = [[cols[dw][dh:dh + TR].reshape(tm, cin) for dw in range(3)]
            for dh in range(3)]

    # One GEMM per output sub-pixel (a, b): pack its 2x2 non-zero taps into K = 4*Cin
    # (no folded-zero overcompute, no multi-dot accumulation chain).
    for a in range(2):
        for b in range(2):
            lhs = jnp.concatenate(
                [taps[a + th][b + tw] for th in range(2) for tw in range(2)],
                axis=-1)                                          # (tm, 4*Cin) bf16
            acc = jnp.dot(lhs, w_ref[2 * a + b],
                          preferred_element_type=jnp.float32)     # (tm, Cout_pad) f32
            acc = acc + bvec
            acc = jnp.where(acc >= 0.0, acc, alpha * acc)         # PReLU in f32
            o_ref[2 * a + b] = acc.astype(o_ref.dtype)


def deconv_block_forward(x_nchw, w_deconv, bias, prelu_alpha):
    """Forward of DeconvBlock(kernel=4, stride=2, padding=1, norm=None, activation='prelu')."""
    N, Cin, H, W = x_nchw.shape
    Cin_w, Cout, KH, KW = w_deconv.shape
    assert (KH, KW) == (4, 4) and Cin_w == Cin

    out_dtype = x_nchw.dtype
    Cout_pad = _round_up(Cout, 128)          # lane-dense GEMM N dim and output stores

    # ---- per-generation VMEM budget / tile target -----------------------------------
    try:
        vmem_cap = int(pltpu.get_tpu_info().vmem_capacity_bytes)
    except Exception:
        vmem_cap = 64 << 20                  # conservative fallback (v7x-sized)
    if vmem_cap >= (96 << 20):               # v5e / v6e: 128 MiB physical VMEM
        budget, target_tm = 96 << 20, 1024
    else:                                    # v7x: 64 MiB physical VMEM
        budget, target_tm = 32 << 20, 512

    def _vmem_estimate(tr):                  # generous working-set estimate (bytes)
        tm_ = tr * W
        lane_c = _round_up(Cin, 128)
        lane_k = _round_up(4 * Cin, 128)
        xp_blk = (tr + 2) * _round_up(W + 2, 16) * lane_c * 2      # bf16 halo block
        w_blk = 4 * _round_up(4 * Cin, 16) * Cout_pad * 2          # bf16 weights
        out_blk = 4 * _round_up(tm_, 16) * Cout_pad * 2            # bf16 out slabs
        taps_b = 9 * _round_up(tm_, 16) * lane_c * 2               # hoisted taps
        lhs_b = 2 * _round_up(tm_, 16) * lane_k * 2                # live lhs temps
        acc_b = 2 * _round_up(tm_, 8) * Cout_pad * 4               # f32 epilogue temps
        return 2 * (xp_blk + out_blk + w_blk) + taps_b + lhs_b + acc_b + (2 << 20)

    TR = max(1, min(H, max(1, target_tm // max(W, 1))))
    while TR > 1 and _vmem_estimate(TR) > budget:    # halo tiling: estimate shrinks with TR
        TR = max(1, TR // 2)
    H_pad = _round_up(H, TR)
    HB = H_pad // TR
    tm = TR * W
    vmem_limit = int(min(max(2 * _vmem_estimate(TR), 48 << 20), int(vmem_cap * 0.85)))

    # ---- activations: NCHW -> zero-padded NHWC bf16, then (TR+2)-row halo windows ---
    x_nhwc = jnp.transpose(x_nchw, (0, 2, 3, 1)).astype(jnp.bfloat16)
    xp = jnp.pad(x_nhwc, ((0, 0), (1, 1 + H_pad - H), (1, 1), (0, 0)))
    xp_halo = jnp.stack([xp[:, r * TR: r * TR + TR + 2] for r in range(HB)], axis=1)
    # -> (N, HB, TR+2, W+2, Cin); small-per-step blocks, no whole-image VMEM residency.

    # ---- fold ConvTranspose2d(k=4,s=2,p=1) weights into 4 sub-pixel GEMM slabs -------
    # Output pixel (2i+a, 2j+b) reads input (i-1+a+th, j-1+b+tw), th,tw in {0,1},
    # with kernel taps kh = 3-a-2*th, kw = 3-b-2*tw.  K order = (th, tw, Cin).
    w32 = w_deconv.astype(jnp.float32)                   # (Cin, Cout, 4, 4)
    slabs = []
    for a in range(2):
        for b in range(2):
            rows = [w32[:, :, 3 - a - 2 * th, 3 - b - 2 * tw]
                    for th in range(2) for tw in range(2)]        # 4 x (Cin, Cout)
            slabs.append(jnp.stack(rows, axis=0).reshape(4 * Cin, Cout))
    wfold = jnp.stack(slabs, axis=0)                              # (4, 4*Cin, Cout)
    wfold = jnp.pad(wfold, ((0, 0), (0, 0), (0, Cout_pad - Cout))).astype(jnp.bfloat16)

    bias_pad = jnp.pad(bias.astype(jnp.float32),
                       (0, Cout_pad - Cout)).reshape(1, Cout_pad)
    alpha = jnp.asarray(prelu_alpha, jnp.float32).reshape(1)

    flops = 2 * N * HB * 4 * tm * (4 * Cin) * Cout_pad
    bytes_accessed = (xp_halo.size * 2 + wfold.size * 2 + bias_pad.size * 4
                      + N * HB * 4 * tm * Cout_pad * 2)

    kernel = functools.partial(_deconv_prelu_kernel, TR=TR, W=W)

    # ---- fused deconv-GEMMs + bias + PReLU -------------------------------------------
    Y = pl.pallas_call(
        kernel,
        out_shape=jax.ShapeDtypeStruct((N, HB, 4, tm, Cout_pad), jnp.bfloat16),
        grid_spec=pltpu.PrefetchScalarGridSpec(
            num_scalar_prefetch=1,                       # PReLU alpha -> SMEM
            grid=(N, HB),                                # batch leads -> megacore splits images
            in_specs=[
                pl.BlockSpec((None, None, TR + 2, W + 2, Cin),
                             lambda n, r, alpha_ref: (n, r, 0, 0, 0)),
                pl.BlockSpec((4, 4 * Cin, Cout_pad),
                             lambda n, r, alpha_ref: (0, 0, 0)),
                pl.BlockSpec((1, Cout_pad),
                             lambda n, r, alpha_ref: (0, 0)),
            ],
            out_specs=pl.BlockSpec((None, None, 4, tm, Cout_pad),
                                   lambda n, r, alpha_ref: (n, r, 0, 0, 0)),
        ),
        compiler_params=pltpu.CompilerParams(
            dimension_semantics=("parallel", "parallel"),
            vmem_limit_bytes=vmem_limit),
        cost_estimate=pl.CostEstimate(flops=flops, transcendentals=0,
                                      bytes_accessed=bytes_accessed),
    )(alpha, xp_halo, wfold, bias_pad)

    # ---- pixel-shuffle the 4 bf16 sub-pixel slabs to NCHW (single transpose pass) ----
    Y = Y.reshape(N, HB, 2, 2, TR, W, Cout_pad)          # (n, hb, a, b, t, w, c)
    out = jnp.transpose(Y, (0, 6, 1, 4, 2, 5, 3))        # (n, c, hb, t, a, w, b)
    out = out.reshape(N, Cout_pad, 2 * H_pad, 2 * W)[:, :Cout, :2 * H, :]
    return out.astype(out_dtype)


def reference_deconv_prelu(x, w, bias, alpha):
    """Pure-JAX reference: ConvTranspose2d(k=4, s=2, p=1) + bias + PReLU (f32)."""
    Cout = w.shape[1]
    w_flip = jnp.transpose(w[:, :, ::-1, ::-1], (1, 0, 2, 3))   # (Cout, Cin, 4, 4)
    y = jax.lax.conv_general_dilated(
        x, w_flip, window_strides=(1, 1), padding=((2, 2), (2, 2)),
        lhs_dilation=(2, 2), rhs_dilation=(1, 1),
        dimension_numbers=('NCHW', 'OIHW', 'NCHW'),
        precision=jax.lax.Precision.HIGHEST)
    y = y + bias.reshape(1, Cout, 1, 1)
    return jnp.where(y >= 0, y, alpha * y)


if __name__ == "__main__":
    key = jax.random.PRNGKey(0)
    k_x, k_w, k_b = jax.random.split(key, 3)

    N, Cin, H, W = 2, 4, 16, 16
    Cout = 8

    x = jax.random.normal(k_x, (N, Cin, H, W), dtype=jnp.float32)
    # ConvTranspose2d weight layout is (Cin, Cout, 4, 4)
    w_deconv = 0.1 * jax.random.normal(k_w, (Cin, Cout, 4, 4), dtype=jnp.float32)
    bias = 0.05 * jax.random.normal(k_b, (Cout,), dtype=jnp.float32)
    prelu_alpha = jnp.float32(0.25)            # torch.nn.PReLU() default init

    fwd = jax.jit(deconv_block_forward)
    out = jax.block_until_ready(fwd(x, w_deconv, bias, prelu_alpha))
    assert out.shape == (N, Cout, 2 * H, 2 * W)

    # Reference on bf16-rounded inputs (kernel GEMM runs in bf16 with f32 accumulate and
    # the kernel stores bf16 slabs, hence the 1e-2 tolerance).
    x_bf = x.astype(jnp.bfloat16).astype(jnp.float32)
    w_bf = w_deconv.astype(jnp.bfloat16).astype(jnp.float32)
    ref = jax.block_until_ready(reference_deconv_prelu(x_bf, w_bf, bias, prelu_alpha))
    np.testing.assert_allclose(np.asarray(out, dtype=np.float32), np.asarray(ref),
                               rtol=1e-2, atol=1e-2)

    print("KERNEL_OK")
</pallas_src>

<mosaic_0001>
module attributes {stable_mosaic.version = 11 : i64} {
  func.func @_deconv_prelu_kernel(%arg0: i32, %arg1: i32, %arg2: memref<1xf32, #tpu.memory_space<smem>>, %arg3: memref<1x1x18x18x4xbf16, #tpu.memory_space<vmem>>, %arg4: memref<4x16x128xbf16, #tpu.memory_space<vmem>>, %arg5: memref<1x128xf32, #tpu.memory_space<vmem>>, %arg6: memref<1x1x4x256x128xbf16, #tpu.memory_space<vmem>>) attributes {dimension_semantics = [#tpu.dimension_semantics<parallel>, #tpu.dimension_semantics<parallel>], iteration_bounds = array<i64: 2, 1>, scalar_prefetch = 1 : i64, scratch_operands = 0 : i64, tpu.core_type = #tpu.core_type<tc>, window_params = [{transform_indices = @transform_0, window_bounds = array<i64: 1, 1, 18, 18, 4>}, {pipeline_mode = #tpu.pipeline_mode<synchronous>, transform_indices = @transform_1, window_bounds = array<i64: 4, 16, 128>}, {pipeline_mode = #tpu.pipeline_mode<synchronous>, transform_indices = @transform_2, window_bounds = array<i64: 1, 128>}, {transform_indices = @transform_3, window_bounds = array<i64: 1, 1, 4, 256, 128>}]} {
    %c0 = arith.constant 0 : index
    %0 = memref.load %arg2[%c0] : memref<1xf32, #tpu.memory_space<smem>>
    %c0_0 = arith.constant 0 : index
    %c0_1 = arith.constant 0 : index
    %1 = vector.load %arg5[%c0_0, %c0_1] : memref<1x128xf32, #tpu.memory_space<vmem>>, vector<1x128xf32>
    %c0_2 = arith.constant 0 : index
    %c0_3 = arith.constant 0 : index
    %c0_4 = arith.constant 0 : index
    %c0_5 = arith.constant 0 : index
    %c0_6 = arith.constant 0 : index
    %2 = vector.load %arg3[%c0_2, %c0_3, %c0_4, %c0_5, %c0_6] : memref<1x1x18x18x4xbf16, #tpu.memory_space<vmem>>, vector<1x1x18x16x4xbf16>
    %3 = vector.shape_cast %2 : vector<1x1x18x16x4xbf16> to vector<18x16x4xbf16>
    %c0_7 = arith.constant 0 : index
    %c0_8 = arith.constant 0 : index
    %c0_9 = arith.constant 0 : index
    %c1 = arith.constant 1 : index
    %c0_10 = arith.constant 0 : index
    %4 = vector.load %arg3[%c0_7, %c0_8, %c0_9, %c1, %c0_10] : memref<1x1x18x18x4xbf16, #tpu.memory_space<vmem>>, vector<1x1x18x16x4xbf16>
    %5 = vector.shape_cast %4 : vector<1x1x18x16x4xbf16> to vector<18x16x4xbf16>
    %c0_11 = arith.constant 0 : index
    %c0_12 = arith.constant 0 : index
    %c0_13 = arith.constant 0 : index
    %c2 = arith.constant 2 : index
    %c0_14 = arith.constant 0 : index
    %6 = vector.load %arg3[%c0_11, %c0_12, %c0_13, %c2, %c0_14] : memref<1x1x18x18x4xbf16, #tpu.memory_space<vmem>>, vector<1x1x18x16x4xbf16>
    %7 = vector.shape_cast %6 : vector<1x1x18x16x4xbf16> to vector<18x16x4xbf16>
    %8 = vector.extract_strided_slice %3 {offsets = [0, 0, 0], sizes = [16, 16, 4], strides = [1, 1, 1]} : vector<18x16x4xbf16> to vector<16x16x4xbf16>
    %9 = vector.shape_cast %8 : vector<16x16x4xbf16> to vector<256x4xbf16>
    %10 = vector.extract_strided_slice %5 {offsets = [0, 0, 0], sizes = [16, 16, 4], strides = [1, 1, 1]} : vector<18x16x4xbf16> to vector<16x16x4xbf16>
    %11 = vector.shape_cast %10 : vector<16x16x4xbf16> to vector<256x4xbf16>
    %12 = vector.extract_strided_slice %7 {offsets = [0, 0, 0], sizes = [16, 16, 4], strides = [1, 1, 1]} : vector<18x16x4xbf16> to vector<16x16x4xbf16>
    %13 = vector.shape_cast %12 : vector<16x16x4xbf16> to vector<256x4xbf16>
    %14 = vector.extract_strided_slice %3 {offsets = [1, 0, 0], sizes = [16, 16, 4], strides = [1, 1, 1]} : vector<18x16x4xbf16> to vector<16x16x4xbf16>
    %15 = vector.shape_cast %14 : vector<16x16x4xbf16> to vector<256x4xbf16>
    %16 = vector.extract_strided_slice %5 {offsets = [1, 0, 0], sizes = [16, 16, 4], strides = [1, 1, 1]} : vector<18x16x4xbf16> to vector<16x16x4xbf16>
    %17 = vector.shape_cast %16 : vector<16x16x4xbf16> to vector<256x4xbf16>
    %18 = vector.extract_strided_slice %7 {offsets = [1, 0, 0], sizes = [16, 16, 4], strides = [1, 1, 1]} : vector<18x16x4xbf16> to vector<16x16x4xbf16>
    %19 = vector.shape_cast %18 : vector<16x16x4xbf16> to vector<256x4xbf16>
    %20 = vector.extract_strided_slice %3 {offsets = [2, 0, 0], sizes = [16, 16, 4], strides = [1, 1, 1]} : vector<18x16x4xbf16> to vector<16x16x4xbf16>
    %21 = vector.shape_cast %20 : vector<16x16x4xbf16> to vector<256x4xbf16>
    %22 = vector.extract_strided_slice %5 {offsets = [2, 0, 0], sizes = [16, 16, 4], strides = [1, 1, 1]} : vector<18x16x4xbf16> to vector<16x16x4xbf16>
    %23 = vector.shape_cast %22 : vector<16x16x4xbf16> to vector<256x4xbf16>
    %24 = vector.extract_strided_slice %7 {offsets = [2, 0, 0], sizes = [16, 16, 4], strides = [1, 1, 1]} : vector<18x16x4xbf16> to vector<16x16x4xbf16>
    %25 = vector.shape_cast %24 : vector<16x16x4xbf16> to vector<256x4xbf16>
    %26 = tpu.concatenate %9, %11, %15, %17 in 1 : vector<256x4xbf16>, vector<256x4xbf16>, vector<256x4xbf16>, vector<256x4xbf16> -> vector<256x16xbf16>
    %c0_15 = arith.constant 0 : index
    %c0_16 = arith.constant 0 : index
    %c0_17 = arith.constant 0 : index
    %27 = vector.load %arg4[%c0_15, %c0_16, %c0_17] : memref<4x16x128xbf16, #tpu.memory_space<vmem>>, vector<1x16x128xbf16>
    %28 = vector.shape_cast %27 : vector<1x16x128xbf16> to vector<16x128xbf16>
    %cst = arith.constant dense<0.000000e+00> : vector<256x128xf32>
    %29 = tpu.matmul %26, %28, %cst {dimension_numbers = #tpu.dot_dimension_numbers<[1], [0], [0], [1], [0, 0, 1, 1], [], []>} : vector<256x16xbf16>, vector<16x128xbf16>, vector<256x128xf32> -> vector<256x128xf32>
    %30 = vector.broadcast %1 : vector<1x128xf32> to vector<256x128xf32>
    %31 = arith.addf %29, %30 : vector<256x128xf32>
    %cst_18 = arith.constant 0.000000e+00 : f32
    %32 = vector.broadcast %cst_18 : f32 to vector<256x128xf32>
    %33 = arith.cmpf oge, %31, %32 : vector<256x128xf32>
    %34 = vector.broadcast %0 : f32 to vector<256x128xf32>
    %35 = arith.mulf %34, %31 : vector<256x128xf32>
    %36 = arith.select %33, %31, %35 : vector<256x128xi1>, vector<256x128xf32>
    %37 = arith.truncf %36 : vector<256x128xf32> to vector<256x128xbf16>
    %c0_19 = arith.constant 0 : index
    %c0_20 = arith.constant 0 : index
    %c0_21 = arith.constant 0 : index
    %c0_22 = arith.constant 0 : index
    %c0_23 = arith.constant 0 : index
    %38 = vector.load %arg6[%c0_19, %c0_20, %c0_21, %c0_22, %c0_23] : memref<1x1x4x256x128xbf16, #tpu.memory_space<vmem>>, vector<1x1x1x256x128xbf16>
    %39 = vector.shape_cast %38 : vector<1x1x1x256x128xbf16> to vector<256x128xbf16>
    %40 = vector.shape_cast %37 : vector<256x128xbf16> to vector<1x1x1x256x128xbf16>
    tpu.vector_store %arg6[%c0_19, %c0_20, %c0_21, %c0_22, %c0_23], %40 {strides = array<i32>} : memref<1x1x4x256x128xbf16, #tpu.memory_space<vmem>>, vector<1x1x1x256x128xbf16>,
    %41 = tpu.concatenate %11, %13, %17, %19 in 1 : vector<256x4xbf16>, vector<256x4xbf16>, vector<256x4xbf16>, vector<256x4xbf16> -> vector<256x16xbf16>
    %c1_24 = arith.constant 1 : index
    %c0_25 = arith.constant 0 : index
    %c0_26 = arith.constant 0 : index
    %42 = vector.load %arg4[%c1_24, %c0_25, %c0_26] : memref<4x16x128xbf16, #tpu.memory_space<vmem>>, vector<1x16x128xbf16>
    %43 = vector.shape_cast %42 : vector<1x16x128xbf16> to vector<16x128xbf16>
    %cst_27 = arith.constant dense<0.000000e+00> : vector<256x128xf32>
    %44 = tpu.matmul %41, %43, %cst_27 {dimension_numbers = #tpu.dot_dimension_numbers<[1], [0], [0], [1], [0, 0, 1, 1], [], []>} : vector<256x16xbf16>, vector<16x128xbf16>, vector<256x128xf32> -> vector<256x128xf32>
    %45 = vector.broadcast %1 : vector<1x128xf32> to vector<256x128xf32>
    %46 = arith.addf %44, %45 : vector<256x128xf32>
    %cst_28 = arith.constant 0.000000e+00 : f32
    %47 = vector.broadcast %cst_28 : f32 to vector<256x128xf32>
    %48 = arith.cmpf oge, %46, %47 : vector<256x128xf32>
    %49 = vector.broadcast %0 : f32 to vector<256x128xf32>
    %50 = arith.mulf %49, %46 : vector<256x128xf32>
    %51 = arith.select %48, %46, %50 : vector<256x128xi1>, vector<256x128xf32>
    %52 = arith.truncf %51 : vector<256x128xf32> to vector<256x128xbf16>
    %c0_29 = arith.constant 0 : index
    %c0_30 = arith.constant 0 : index
    %c1_31 = arith.constant 1 : index
    %c0_32 = arith.constant 0 : index
    %c0_33 = arith.constant 0 : index
    %53 = vector.load %arg6[%c0_29, %c0_30, %c1_31, %c0_32, %c0_33] : memref<1x1x4x256x128xbf16, #tpu.memory_space<vmem>>, vector<1x1x1x256x128xbf16>
    %54 = vector.shape_cast %53 : vector<1x1x1x256x128xbf16> to vector<256x128xbf16>
    %55 = vector.shape_cast %52 : vector<256x128xbf16> to vector<1x1x1x256x128xbf16>
    tpu.vector_store %arg6[%c0_29, %c0_30, %c1_31, %c0_32, %c0_33], %55 {strides = array<i32>} : memref<1x1x4x256x128xbf16, #tpu.memory_space<vmem>>, vector<1x1x1x256x128xbf16>,
    %56 = tpu.concatenate %15, %17, %21, %23 in 1 : vector<256x4xbf16>, vector<256x4xbf16>, vector<256x4xbf16>, vector<256x4xbf16> -> vector<256x16xbf16>
    %c2_34 = arith.constant 2 : index
    %c0_35 = arith.constant 0 : index
    %c0_36 = arith.constant 0 : index
    %57 = vector.load %arg4[%c2_34, %c0_35, %c0_36] : memref<4x16x128xbf16, #tpu.memory_space<vmem>>, vector<1x16x128xbf16>
    %58 = vector.shape_cast %57 : vector<1x16x128xbf16> to vector<16x128xbf16>
    %cst_37 = arith.constant dense<0.000000e+00> : vector<256x128xf32>
    %59 = tpu.matmul %56, %58, %cst_37 {dimension_numbers = #tpu.dot_dimension_numbers<[1], [0], [0], [1], [0, 0, 1, 1], [], []>} : vector<256x16xbf16>, vector<16x128xbf16>, vector<256x128xf32> -> vector<256x128xf32>
    %60 = vector.broadcast %1 : vector<1x128xf32> to vector<256x128xf32>
    %61 = arith.addf %59, %60 : vector<256x128xf32>
    %cst_38 = arith.constant 0.000000e+00 : f32
    %62 = vector.broadcast %cst_38 : f32 to vector<256x128xf32>
    %63 = arith.cmpf oge, %61, %62 : vector<256x128xf32>
    %64 = vector.broadcast %0 : f32 to vector<256x128xf32>
    %65 = arith.mulf %64, %61 : vector<256x128xf32>
    %66 = arith.select %63, %61, %65 : vector<256x128xi1>, vector<256x128xf32>
    %67 = arith.truncf %66 : vector<256x128xf32> to vector<256x128xbf16>
    %c0_39 = arith.constant 0 : index
    %c0_40 = arith.constant 0 : index
    %c2_41 = arith.constant 2 : index
    %c0_42 = arith.constant 0 : index
    %c0_43 = arith.constant 0 : index
    %68 = vector.load %arg6[%c0_39, %c0_40, %c2_41, %c0_42, %c0_43] : memref<1x1x4x256x128xbf16, #tpu.memory_space<vmem>>, vector<1x1x1x256x128xbf16>
    %69 = vector.shape_cast %68 : vector<1x1x1x256x128xbf16> to vector<256x128xbf16>
    %70 = vector.shape_cast %67 : vector<256x128xbf16> to vector<1x1x1x256x128xbf16>
    tpu.vector_store %arg6[%c0_39, %c0_40, %c2_41, %c0_42, %c0_43], %70 {strides = array<i32>} : memref<1x1x4x256x128xbf16, #tpu.memory_space<vmem>>, vector<1x1x1x256x128xbf16>,
    %71 = tpu.concatenate %17, %19, %23, %25 in 1 : vector<256x4xbf16>, vector<256x4xbf16>, vector<256x4xbf16>, vector<256x4xbf16> -> vector<256x16xbf16>
    %c3 = arith.constant 3 : index
    %c0_44 = arith.constant 0 : index
    %c0_45 = arith.constant 0 : index
    %72 = vector.load %arg4[%c3, %c0_44, %c0_45] : memref<4x16x128xbf16, #tpu.memory_space<vmem>>, vector<1x16x128xbf16>
    %73 = vector.shape_cast %72 : vector<1x16x128xbf16> to vector<16x128xbf16>
    %cst_46 = arith.constant dense<0.000000e+00> : vector<256x128xf32>
    %74 = tpu.matmul %71, %73, %cst_46 {dimension_numbers = #tpu.dot_dimension_numbers<[1], [0], [0], [1], [0, 0, 1, 1], [], []>} : vector<256x16xbf16>, vector<16x128xbf16>, vector<256x128xf32> -> vector<256x128xf32>
    %75 = vector.broadcast %1 : vector<1x128xf32> to vector<256x128xf32>
    %76 = arith.addf %74, %75 : vector<256x128xf32>
    %cst_47 = arith.constant 0.000000e+00 : f32
    %77 = vector.broadcast %cst_47 : f32 to vector<256x128xf32>
    %78 = arith.cmpf oge, %76, %77 : vector<256x128xf32>
    %79 = vector.broadcast %0 : f32 to vector<256x128xf32>
    %80 = arith.mulf %79, %76 : vector<256x128xf32>
    %81 = arith.select %78, %76, %80 : vector<256x128xi1>, vector<256x128xf32>
    %82 = arith.truncf %81 : vector<256x128xf32> to vector<256x128xbf16>
    %c0_48 = arith.constant 0 : index
    %c0_49 = arith.constant 0 : index
    %c3_50 = arith.constant 3 : index
    %c0_51 = arith.constant 0 : index
    %c0_52 = arith.constant 0 : index
    %83 = vector.load %arg6[%c0_48, %c0_49, %c3_50, %c0_51, %c0_52] : memref<1x1x4x256x128xbf16, #tpu.memory_space<vmem>>, vector<1x1x1x256x128xbf16>
    %84 = vector.shape_cast %83 : vector<1x1x1x256x128xbf16> to vector<256x128xbf16>
    %85 = vector.shape_cast %82 : vector<256x128xbf16> to vector<1x1x1x256x128xbf16>
    tpu.vector_store %arg6[%c0_48, %c0_49, %c3_50, %c0_51, %c0_52], %85 {strides = array<i32>} : memref<1x1x4x256x128xbf16, #tpu.memory_space<vmem>>, vector<1x1x1x256x128xbf16>,
    return
  }
  func.func @transform_0(%arg0: i32, %arg1: i32, %arg2: memref<1xf32, #tpu.memory_space<smem>>) -> (i32, i32, i32, i32, i32) {
    %c0_i32 = arith.constant 0 : i32
    %c0_i32_0 = arith.constant 0 : i32
    %c0_i32_1 = arith.constant 0 : i32
    %c0_i32_2 = arith.constant 0 : i32
    return %arg0, %arg1, %c0_i32, %c0_i32_0, %c0_i32_1 : i32, i32, i32, i32, i32
  }
  func.func @transform_1(%arg0: i32, %arg1: i32, %arg2: memref<1xf32, #tpu.memory_space<smem>>) -> (i32, i32, i32) {
    %c0_i32 = arith.constant 0 : i32
    %c0_i32_0 = arith.constant 0 : i32
    %c0_i32_1 = arith.constant 0 : i32
    %c0_i32_2 = arith.constant 0 : i32
    return %c0_i32, %c0_i32_0, %c0_i32_1 : i32, i32, i32
  }
  func.func @transform_2(%arg0: i32, %arg1: i32, %arg2: memref<1xf32, #tpu.memory_space<smem>>) -> (i32, i32) {
    %c0_i32 = arith.constant 0 : i32
    %c0_i32_0 = arith.constant 0 : i32
    %c0_i32_1 = arith.constant 0 : i32
    return %c0_i32, %c0_i32_0 : i32, i32
  }
  func.func @transform_3(%arg0: i32, %arg1: i32, %arg2: memref<1xf32, #tpu.memory_space<smem>>) -> (i32, i32, i32, i32, i32) {
    %c0_i32 = arith.constant 0 : i32
    %c0_i32_0 = arith.constant 0 : i32
    %c0_i32_1 = arith.constant 0 : i32
    %c0_i32_2 = arith.constant 0 : i32
    return %arg0, %arg1, %c0_i32, %c0_i32_0, %c0_i32_1 : i32, i32, i32, i32, i32
  }
}

</mosaic_0001>

<llo_original>
// kernel: deconv_block_forward.1
$region0: #{deconv_block_forward.1}
  #allocation0 [shape = 'u32[]', space=smem, size = 0x4, offset = 0x4, fixed_abs, tag = 'smem constant byte address 0x4 - core index']
  #allocation1 [shape = 'u32[144,128]{1,0:T(1,128)}', space=vmem, size = 0x12000, scoped, tag = 'internal scratch']
  #allocation2 [shape = 's32[1]{0}', space=sflag, size = 0x4, scoped, tag = 'scoped memory for deconv_block_forward.1']
  #allocation3 [shape = 'f32[1]{0:T(128)S(6)}', space=smem, size = 0x200, scoped, tag = 'prefetched SMEM operand 0']
  %s0 = inlined_call_operand.<no memory space> [shape: f32[1], index: 0, kind: input, shape index: {}]
  %s1 = inlined_call_operand.vmem [shape: bf16[2,1,18,18,4], index: 1, kind: input, shape index: {}]
  %s2 = inlined_call_operand.vmem [shape: bf16[4,16,128], index: 2, kind: input, shape index: {}]
  %s3 = inlined_call_operand.vmem [shape: f32[1,128], index: 3, kind: input, shape index: {}]
  %s4 = inlined_call_operand.vmem [shape: bf16[2,1,4,256,128], index: 4, kind: output, shape index: {}]
  %s5 = sld [smem:[#allocation0]]
  $region45: #{deconv_block_forward.1} parent=0
    _
  %s7 = ssub.s32 1, %s5
  %s8 = scalar_select 0, %s7, %s5
  %9 = sst [smem:[#allocation3]] %s0
  loop: start=0, step=1, limit=4
  $region2: #{deconv_block_forward.1} parent=0 // loop_pre_header
    _
  $region3: #{deconv_block_forward.1} parent=0 // loop_header
    %s11 = sphi 0, %s15
    %p12 = scmp.ge.s32.totalorder %s11, 4
    %s18 = sphi 0, %s30
    %s19 = sphi 0, %s26
    %s20 = sphi 0, %s18
    %s21 = sphi 0, %s19
    %s22 = sphi 0, %s20
    %s23 = sphi 0, %s21
    %s35 = sphi 0, %s37
    %s38 = sphi 0, %s35
    %s39 = sphi 0, %s38
    %s55 = sphi 0, %s39
    %s59 = sphi 0, %s59
    %s61 = sphi 0, %s59
    %s62 = sphi 0, %s61
    %s76 = sphi 0, %s62
    %s80 = sphi 0, %s80
    %s82 = sphi 0, %s80
    %s83 = sphi 0, %s82
    %s97 = sphi 0, %s83
    %s105 = sphi 0, %s107
    %s108 = sphi 0, %s105
    %s109 = sphi 0, %s108
    %s125 = sphi 0, %s109
  $region4: #{deconv_block_forward.1} parent=0 // loop_header_branch
    %14 = sbr.rel (%p12) target = $region8
  $region5: #{deconv_block_forward.1} parent=0 // loop_body
    %s16 = ssub.s32 %s11, 1
    %s17 = ssub.s32 %s11, 2
    %s24 = sadd.s32 1, %s19
    %p25 = scmp.ge.s32.totalorder %s24, 1
    %s26 = scalar_select %p25, 0, %s24
    %s27 = sadd.s32 1, %s18
    %s28 = scalar_select %p25, %s27, %s18
    %p29 = scmp.ge.s32.totalorder %s28, 2
    %s30 = scalar_select %p29, 0, %s28
    %s31 = ssub.s32 %s18, %s30
    %s32 = ssub.s32 %s19, %s26
    %s33 = sor.u32 %s31, %s32
    %p34 = scmp.eq.s32.totalorder %s33, 0
    %s36 = sadd.s32 %s35, 1
    %s37 = scalar_select %p34, %s35, %s36
    %p40 = pneg %p34
    %p41 = scmp.eq.s32.totalorder %s11, 1
    %p42 = por %p40, %p41
    %p43 = scmp.ne.s32.totalorder %s35, %s38
    %p44 = scmp.eq.s32.totalorder %s11, 0
    %p45 = por %p43, %p44
    %p46 = scmp.ne.s32.totalorder %s35, %s38
    %p47 = scmp.eq.s32.totalorder %s16, 1
    %p48 = por %p46, %p47
    %p49 = scmp.ne.s32.totalorder %s38, %s39
    %p50 = scmp.eq.s32.totalorder %s16, 0
    %p51 = por %p49, %p50
    %p52 = scmp.ne.s32.totalorder %s38, %s39
    %p53 = scmp.eq.s32.totalorder %s17, 1
    %p54 = por %p52, %p53
    %p56 = scmp.ne.s32.totalorder %s39, %s55
    %p57 = scmp.eq.s32.totalorder %s17, 0
    %p58 = por %p56, %p57
    %s60 = sadd.s32 %s59, 1
    %p63 = scmp.eq.s32.totalorder %s11, 1
    %p64 = scmp.ne.s32.totalorder %s59, %s61
    %p65 = scmp.eq.s32.totalorder %s11, 0
    %p66 = por %p64, %p65
    %p67 = scmp.ne.s32.totalorder %s59, %s61
    %p68 = scmp.eq.s32.totalorder %s16, 1
    %p69 = por %p67, %p68
    %p70 = scmp.ne.s32.totalorder %s61, %s62
    %p71 = scmp.eq.s32.totalorder %s16, 0
    %p72 = por %p70, %p71
    %p73 = scmp.ne.s32.totalorder %s61, %s62
    %p74 = scmp.eq.s32.totalorder %s17, 1
    %p75 = por %p73, %p74
    %p77 = scmp.ne.s32.totalorder %s62, %s76
    %p78 = scmp.eq.s32.totalorder %s17, 0
    %p79 = por %p77, %p78
    %s81 = sadd.s32 %s80, 1
    %p84 = scmp.eq.s32.totalorder %s11, 1
    %p85 = scmp.ne.s32.totalorder %s80, %s82
    %p86 = scmp.eq.s32.totalorder %s11, 0
    %p87 = por %p85, %p86
    %p88 = scmp.ne.s32.totalorder %s80, %s82
    %p89 = scmp.eq.s32.totalorder %s16, 1
    %p90 = por %p88, %p89
    %p91 = scmp.ne.s32.totalorder %s82, %s83
    %p92 = scmp.eq.s32.totalorder %s16, 0
    %p93 = por %p91, %p92
    %p94 = scmp.ne.s32.totalorder %s82, %s83
    %p95 = scmp.eq.s32.totalorder %s17, 1
    %p96 = por %p94, %p95
    %p98 = scmp.ne.s32.totalorder %s83, %s97
    %p99 = scmp.eq.s32.totalorder %s17, 0
    %p100 = por %p98, %p99
    %s101 = ssub.s32 %s18, %s30
    %s102 = ssub.s32 %s19, %s26
    %s103 = sor.u32 %s101, %s102
    %p104 = scmp.eq.s32.totalorder %s103, 0
    %s106 = sadd.s32 %s105, 1
    %s107 = scalar_select %p104, %s105, %s106
    %p110 = pneg %p104
    %p111 = scmp.eq.s32.totalorder %s11, 1
    %p112 = por %p110, %p111
    %p113 = scmp.ne.s32.totalorder %s105, %s108
    %p114 = scmp.eq.s32.totalorder %s11, 0
    %p115 = por %p113, %p114
    %p116 = scmp.ne.s32.totalorder %s105, %s108
    %p117 = scmp.eq.s32.totalorder %s16, 1
    %p118 = por %p116, %p117
    %p119 = scmp.ne.s32.totalorder %s108, %s109
    %p120 = scmp.eq.s32.totalorder %s16, 0
    %p121 = por %p119, %p120
    %p122 = scmp.ne.s32.totalorder %s108, %s109
    %p123 = scmp.eq.s32.totalorder %s17, 1
    %p124 = por %p122, %p123
    %p126 = scmp.ne.s32.totalorder %s109, %s125
    %p127 = scmp.eq.s32.totalorder %s17, 0
    %p128 = por %p126, %p127
    %p129 = scmp.le.s32.totalorder 1, %s11
    %p130 = scmp.lt.s32.totalorder %s11, 3
    %p131 = pnand %p129, %p130
    %p132 = pneg %p131
    // Predicated region
    $region9: #{deconv_block_forward.1} parent=5 // pred_check
      _
    $region10: #{deconv_block_forward.1} parent=5 // pred_check_branch
      %134 = sbr.rel (%p131) target = $region12
    $region11: #{deconv_block_forward.1} parent=5 // pred_region
      %s135 = ssub.s32 %s11, 1
      // Predicated region
      $region13: #{deconv_block_forward.1} parent=11 // pred_check
        %p136 = pneg %p72
      $region14: #{deconv_block_forward.1} parent=11 // pred_check_branch
        %138 = sbr.rel (%p136) target = $region16
      $region15: #{deconv_block_forward.1} parent=11 // pred_region
        _
      $region16: #{deconv_block_forward.1} parent=11 // pred_fallthru
        _
      // Predicated region
      $region17: #{deconv_block_forward.1} parent=11 // pred_check
        %p139 = pneg %p93
      $region18: #{deconv_block_forward.1} parent=11 // pred_check_branch
        %141 = sbr.rel (%p139) target = $region20
      $region19: #{deconv_block_forward.1} parent=11 // pred_region
        _
      $region20: #{deconv_block_forward.1} parent=11 // pred_fallthru
        _
    $region12: #{deconv_block_forward.1} parent=5 // pred_fallthru
      _
    %p142 = scmp.lt.s32.totalorder %s11, 2
    // Predicated region
    $region21: #{deconv_block_forward.1} parent=5 // pred_check
      %p143 = pneg %p142
    $region22: #{deconv_block_forward.1} parent=5 // pred_check_branch
      %145 = sbr.rel (%p143) target = $region24
    $region23: #{deconv_block_forward.1} parent=5 // pred_region
      // Predicated region
      $region25: #{deconv_block_forward.1} parent=23 // pred_check
        %p146 = pneg %p45
      $region26: #{deconv_block_forward.1} parent=23 // pred_check_branch
        %148 = sbr.rel (%p146) target = $region28
      $region27: #{deconv_block_forward.1} parent=23 // pred_region
        %p149 = scmp.lt.s32.totalorder %s18, 1
        %s150 = scalar_select %p149, %s18, 1
        %p151 = scmp.lt.s32.totalorder %s19, 0
        %s152 = scalar_select %p151, %s19, 0
        %s153 = smul.addr %s152, 54
        %s154 = smul.addr %s150, 54
        %s155 = sadd.s32 %s153, %s154
        %s156 = smul.addr %s155, 4
        %s157 = scalar_lea.vmem %s1, %s156
      $region28: #{deconv_block_forward.1} parent=23 // pred_fallthru
        _
    $region24: #{deconv_block_forward.1} parent=5 // pred_fallthru
      _
    %p158 = scmp.le.s32.totalorder 1, %s11
    %p159 = scmp.lt.s32.totalorder %s11, 3
    %p160 = pnand %p158, %p159
    %p161 = pneg %p160
    // Predicated region
    $region29: #{deconv_block_forward.1} parent=5 // pred_check
      _
    $region30: #{deconv_block_forward.1} parent=5 // pred_check_branch
      %163 = sbr.rel (%p160) target = $region32
    $region31: #{deconv_block_forward.1} parent=5 // pred_region
      %s164 = ssub.s32 %s11, 1
      %p165 = scmp.lt.s32.totalorder %s20, 1
      %s166 = scalar_select %p165, %s20, 1
      %p167 = scmp.lt.s32.totalorder %s21, 0
      %s168 = scalar_select %p167, %s21, 0
      %s169 = smul.addr %s168, 54
      %s170 = smul.addr %s166, 54
      %s171 = sadd.s32 %s169, %s170
      %s172 = smul.addr %s171, 4
      %s173 = scalar_lea.vmem %s1, %s172
      %p174 = pneg %p51
      %p175 = pneg %p48
      %p176 = pneg %p72
      %p177 = pneg %p69
      %p178 = pneg %p93
      %p179 = pneg %p90
      %p180 = pneg %p121
      %p181 = pneg %p118
      %p182 = scmp.lt.s32.totalorder %s20, 1
      %s183 = scalar_select %p182, %s20, 1
      %p184 = scmp.lt.s32.totalorder %s21, 0
      %s185 = scalar_select %p184, %s21, 0
      %s186 = smul.addr %s185, 128
      %s187 = smul.addr %s183, 128
      %s188 = sadd.s32 %s186, %s187
      %s189 = smul.addr %s188, 4
      %s190 = scalar_lea.vmem %s4, %s189
      %p191 = scmp.lt.s32.totalorder %s20, 1
      %s192 = scalar_select %p191, %s20, 1
      %p193 = scmp.lt.s32.totalorder %s21, 0
      %s194 = scalar_select %p193, %s21, 0
      %s195 = smul.addr %s194, 54
      %s196 = smul.addr %s192, 54
      %s197 = sadd.s32 %s195, %s196
      %s198 = smul.addr %s197, 4
      %s199 = scalar_lea.vmem %s1, %s198
      %p200 = scmp.lt.s32.totalorder %s20, 1
      %s201 = scalar_select %p200, %s20, 1
      %p202 = scmp.lt.s32.totalorder %s21, 0
      %s203 = scalar_select %p202, %s21, 0
      %s204 = smul.addr %s203, 128
      %s205 = smul.addr %s201, 128
      %s206 = sadd.s32 %s204, %s205
      %s207 = smul.addr %s206, 4
      %s208 = scalar_lea.vmem %s4, %s207
      %s210 = sld [smem:[#allocation3]]
      %v211 = vld [vmem:[%s3] sm:$0x1]
      %v212 = vld [vmem:[%s199] sm:$0xf]
      %v213 = vld [vmem:[%s199 + $0x4] sm:$0xf]
      %v214 = vld [vmem:[%s199 + $0xc] sm:$0xf]
      %v215 = vld [vmem:[%s199 + $0x10] sm:$0xf]
      %v216 = vld [vmem:[%s199 + $0x18] sm:$0xf]
      %v217 = vld [vmem:[%s199 + $0x1c] sm:$0xf]
      %v218 = vld [vmem:[%s199 + $0x24] sm:$0xf]
      %v219 = vld [vmem:[%s199 + $0x28] sm:$0xf]
      %v220 = vld [vmem:[%s199 + $0x30] sm:$0xf]
      %v221 = vld [vmem:[%s199 + $0x34] sm:$0xf]
      %v222 = vld [vmem:[%s199 + $0x3c] sm:$0xf]
      %v223 = vld [vmem:[%s199 + $0x40] sm:$0xf]
      %v224 = vld [vmem:[%s199 + $0x48] sm:$0xf]
      %v225 = vld [vmem:[%s199 + $0x4c] sm:$0xf]
      %v226 = vld [vmem:[%s199 + $0x54] sm:$0xf]
      %v227 = vld [vmem:[%s199 + $0x58] sm:$0xf]
      %v228 = vld [vmem:[%s199 + $0x60] sm:$0xf]
      %v229 = vld [vmem:[%s199 + $0x64] sm:$0xf]
      %v230 = vld [vmem:[%s199 + $0x6c] sm:$0xf]
      %v231 = vld [vmem:[%s199 + $0x70] sm:$0xf]
      %v232 = vld [vmem:[%s199 + $0x78] sm:$0xf]
      %v233 = vld [vmem:[%s199 + $0x7c] sm:$0xf]
      %v234 = vld [vmem:[%s199 + $0x84] sm:$0xf]
      %v235 = vld [vmem:[%s199 + $0x88] sm:$0xf]
      %v236 = vld [vmem:[%s199 + $0x90] sm:$0xf]
      %v237 = vld [vmem:[%s199 + $0x94] sm:$0xf]
      %v238 = vld [vmem:[%s199 + $0x9c] sm:$0xf]
      %v239 = vld [vmem:[%s199 + $0xa0] sm:$0xf]
      %v240 = vld [vmem:[%s199 + $0xa8] sm:$0xf]
      %v241 = vld [vmem:[%s199 + $0xac] sm:$0xf]
      %v242 = vld [vmem:[%s199 + $0xb4] sm:$0xf]
      %v243 = vld [vmem:[%s199 + $0xb8] sm:$0xf]
      %v244 = vld [vmem:[%s199 + $0xc0] sm:$0xf]
      %v245 = vld [vmem:[%s199 + $0xc4] sm:$0xf]
      %v246 = vld [vmem:[%s199 + $0xcc] sm:$0xf]
      %v247 = vld [vmem:[%s199 + $0xd0] sm:$0xf]
      %v248 = vld [vmem:[%s199 + $0x8] sm:$0x1]
      %v249 = vld [vmem:[%s199 + $0x14] sm:$0x1]
      %v250 = vld [vmem:[%s199 + $0x20] sm:$0x1]
      %v251 = vld [vmem:[%s199 + $0x2c] sm:$0x1]
      %v252 = vld [vmem:[%s199 + $0x38] sm:$0x1]
      %v253 = vld [vmem:[%s199 + $0x44] sm:$0x1]
      %v254 = vld [vmem:[%s199 + $0x50] sm:$0x1]
      %v255 = vld [vmem:[%s199 + $0x5c] sm:$0x1]
      %v256 = vld [vmem:[%s199 + $0x68] sm:$0x1]
      %v257 = vld [vmem:[%s199 + $0x74] sm:$0x1]
      %v258 = vld [vmem:[%s199 + $0x80] sm:$0x1]
      %v259 = vld [vmem:[%s199 + $0x8c] sm:$0x1]
      %v260 = vld [vmem:[%s199 + $0x98] sm:$0x1]
      %v261 = vld [vmem:[%s199 + $0xa4] sm:$0x1]
      %v262 = vld [vmem:[%s199 + $0xb0] sm:$0x1]
      %v263 = vld [vmem:[%s199 + $0xbc] sm:$0x1]
      %v264 = vld [vmem:[%s199 + $0xc8] sm:$0x1]
      %v265 = vld [vmem:[%s199 + $0xd4] sm:$0x1]
      %v266 = vld [vmem:[%s199] sm:$0xe]
      %v267 = vld [vmem:[%s199 + $0xc] sm:$0xe]
      %v268 = vld [vmem:[%s199 + $0x18] sm:$0xe]
      %v269 = vld [vmem:[%s199 + $0x24] sm:$0xe]
      %v270 = vld [vmem:[%s199 + $0x30] sm:$0xe]
      %v271 = vld [vmem:[%s199 + $0x3c] sm:$0xe]
      %v272 = vld [vmem:[%s199 + $0x48] sm:$0xe]
      %v273 = vld [vmem:[%s199 + $0x54] sm:$0xe]
      %v274 = vld [vmem:[%s199 + $0x60] sm:$0xe]
      %v275 = vld [vmem:[%s199 + $0x6c] sm:$0xe]
      %v276 = vld [vmem:[%s199 + $0x78] sm:$0xe]
      %v277 = vld [vmem:[%s199 + $0x84] sm:$0xe]
      %v278 = vld [vmem:[%s199 + $0x90] sm:$0xe]
      %v279 = vld [vmem:[%s199 + $0x9c] sm:$0xe]
      %v280 = vld [vmem:[%s199 + $0xa8] sm:$0xe]
      %v281 = vld [vmem:[%s199 + $0xb4] sm:$0xe]
      %v282 = vld [vmem:[%s199 + $0xc0] sm:$0xe]
      %v283 = vld [vmem:[%s199 + $0xcc] sm:$0xe]
      %vm284 = vsmask.f32 3328
      %vm285 = vsmask.f32 7440
      %vm286 = vmor %vm284, %vm285
      %v288 = vshrl.u32 %v212, 16
      %v290 = vrot.slane %v288, 4
      %v291 = vshll.u32 %v212, 16
      %v293 = vrot.slane %v291, 5
      %v294 = vor.u32 %v290, %v293
      %v295 = vrot.slane %v294, 4
      %v297 = vshll.u32 %v213, 16
      %v299 = vrot.slane %v297, 5
      %v300 = vsel %vm286, %v295, %v299
      %v301 = vshrl.u32 %v213, 16
      %v303 = vrot.slane %v301, 4
      %v304 = vor.u32 %v303, %v299
      %v305 = vrot.slane %v304, 4
      %v307 = vshll.u32 %v248, 16
      %v309 = vrot.slane %v307, 5
      %v310 = vsel %vm286, %v305, %v309
      %v312 = vshrl.u32 %v214, 16
      %v314 = vrot.slane %v312, 4
      %v315 = vshll.u32 %v214, 16
      %v317 = vrot.slane %v315, 5
      %v318 = vor.u32 %v314, %v317
      %v319 = vrot.slane %v318, 4
      %v321 = vshll.u32 %v215, 16
      %v323 = vrot.slane %v321, 5
      %v324 = vsel %vm286, %v319, %v323
      %v325 = vshrl.u32 %v215, 16
      %v327 = vrot.slane %v325, 4
      %v328 = vor.u32 %v327, %v323
      %v329 = vrot.slane %v328, 4
      %v331 = vshll.u32 %v249, 16
      %v333 = vrot.slane %v331, 5
      %v334 = vsel %vm286, %v329, %v333
      %v336 = vshrl.u32 %v216, 16
      %v338 = vrot.slane %v336, 4
      %v339 = vshll.u32 %v216, 16
      %v341 = vrot.slane %v339, 5
      %v342 = vor.u32 %v338, %v341
      %v343 = vrot.slane %v342, 4
      %v345 = vshll.u32 %v217, 16
      %v347 = vrot.slane %v345, 5
      %v348 = vsel %vm286, %v343, %v347
      %v349 = vshrl.u32 %v217, 16
      %v351 = vrot.slane %v349, 4
      %v352 = vor.u32 %v351, %v347
      %v353 = vrot.slane %v352, 4
      %v355 = vshll.u32 %v250, 16
      %v357 = vrot.slane %v355, 5
      %v358 = vsel %vm286, %v353, %v357
      %v360 = vshrl.u32 %v218, 16
      %v362 = vrot.slane %v360, 4
      %v363 = vshll.u32 %v218, 16
      %v365 = vrot.slane %v363, 5
      %v366 = vor.u32 %v362, %v365
      %v367 = vrot.slane %v366, 4
      %v369 = vshll.u32 %v219, 16
      %v371 = vrot.slane %v369, 5
      %v372 = vsel %vm286, %v367, %v371
      %v373 = vshrl.u32 %v219, 16
      %v375 = vrot.slane %v373, 4
      %v376 = vor.u32 %v375, %v371
      %v377 = vrot.slane %v376, 4
      %v379 = vshll.u32 %v251, 16
      %v381 = vrot.slane %v379, 5
      %v382 = vsel %vm286, %v377, %v381
      %v384 = vshrl.u32 %v220, 16
      %v386 = vrot.slane %v384, 4
      %v387 = vshll.u32 %v220, 16
      %v389 = vrot.slane %v387, 5
      %v390 = vor.u32 %v386, %v389
      %v391 = vrot.slane %v390, 4
      %v393 = vshll.u32 %v221, 16
      %v395 = vrot.slane %v393, 5
      %v396 = vsel %vm286, %v391, %v395
      %v397 = vshrl.u32 %v221, 16
      %v399 = vrot.slane %v397, 4
      %v400 = vor.u32 %v399, %v395
      %v401 = vrot.slane %v400, 4
      %v403 = vshll.u32 %v252, 16
      %v405 = vrot.slane %v403, 5
      %v406 = vsel %vm286, %v401, %v405
      %v408 = vshrl.u32 %v222, 16
      %v410 = vrot.slane %v408, 4
      %v411 = vshll.u32 %v222, 16
      %v413 = vrot.slane %v411, 5
      %v414 = vor.u32 %v410, %v413
      %v415 = vrot.slane %v414, 4
      %v417 = vshll.u32 %v223, 16
      %v419 = vrot.slane %v417, 5
      %v420 = vsel %vm286, %v415, %v419
      %v421 = vshrl.u32 %v223, 16
      %v423 = vrot.slane %v421, 4
      %v424 = vor.u32 %v423, %v419
      %v425 = vrot.slane %v424, 4
      %v427 = vshll.u32 %v253, 16
      %v429 = vrot.slane %v427, 5
      %v430 = vsel %vm286, %v425, %v429
      %v432 = vshrl.u32 %v224, 16
      %v434 = vrot.slane %v432, 4
      %v435 = vshll.u32 %v224, 16
      %v437 = vrot.slane %v435, 5
      %v438 = vor.u32 %v434, %v437
      %v439 = vrot.slane %v438, 4
      %v441 = vshll.u32 %v225, 16
      %v443 = vrot.slane %v441, 5
      %v444 = vsel %vm286, %v439, %v443
      %v445 = vshrl.u32 %v225, 16
      %v447 = vrot.slane %v445, 4
      %v448 = vor.u32 %v447, %v443
      %v449 = vrot.slane %v448, 4
      %v451 = vshll.u32 %v254, 16
      %v453 = vrot.slane %v451, 5
      %v454 = vsel %vm286, %v449, %v453
      %v456 = vshrl.u32 %v226, 16
      %v458 = vrot.slane %v456, 4
      %v459 = vshll.u32 %v226, 16
      %v461 = vrot.slane %v459, 5
      %v462 = vor.u32 %v458, %v461
      %v463 = vrot.slane %v462, 4
      %v465 = vshll.u32 %v227, 16
      %v467 = vrot.slane %v465, 5
      %v468 = vsel %vm286, %v463, %v467
      %v469 = vshrl.u32 %v227, 16
      %v471 = vrot.slane %v469, 4
      %v472 = vor.u32 %v471, %v467
      %v473 = vrot.slane %v472, 4
      %v475 = vshll.u32 %v255, 16
      %v477 = vrot.slane %v475, 5
      %v478 = vsel %vm286, %v473, %v477
      %v480 = vshrl.u32 %v228, 16
      %v482 = vrot.slane %v480, 4
      %v483 = vshll.u32 %v228, 16
      %v485 = vrot.slane %v483, 5
      %v486 = vor.u32 %v482, %v485
      %v487 = vrot.slane %v486, 4
      %v489 = vshll.u32 %v229, 16
      %v491 = vrot.slane %v489, 5
      %v492 = vsel %vm286, %v487, %v491
      %v493 = vshrl.u32 %v229, 16
      %v495 = vrot.slane %v493, 4
      %v496 = vor.u32 %v495, %v491
      %v497 = vrot.slane %v496, 4
      %v499 = vshll.u32 %v256, 16
      %v501 = vrot.slane %v499, 5
      %v502 = vsel %vm286, %v497, %v501
      %v504 = vshrl.u32 %v230, 16
      %v506 = vrot.slane %v504, 4
      %v507 = vshll.u32 %v230, 16
      %v509 = vrot.slane %v507, 5
      %v510 = vor.u32 %v506, %v509
      %v511 = vrot.slane %v510, 4
      %v513 = vshll.u32 %v231, 16
      %v515 = vrot.slane %v513, 5
      %v516 = vsel %vm286, %v511, %v515
      %v517 = vshrl.u32 %v231, 16
      %v519 = vrot.slane %v517, 4
      %v520 = vor.u32 %v519, %v515
      %v521 = vrot.slane %v520, 4
      %v523 = vshll.u32 %v257, 16
      %v525 = vrot.slane %v523, 5
      %v526 = vsel %vm286, %v521, %v525
      %v528 = vshrl.u32 %v232, 16
      %v530 = vrot.slane %v528, 4
      %v531 = vshll.u32 %v232, 16
      %v533 = vrot.slane %v531, 5
      %v534 = vor.u32 %v530, %v533
      %v535 = vrot.slane %v534, 4
      %v537 = vshll.u32 %v233, 16
      %v539 = vrot.slane %v537, 5
      %v540 = vsel %vm286, %v535, %v539
      %v541 = vshrl.u32 %v233, 16
      %v543 = vrot.slane %v541, 4
      %v544 = vor.u32 %v543, %v539
      %v545 = vrot.slane %v544, 4
      %v547 = vshll.u32 %v258, 16
      %v549 = vrot.slane %v547, 5
      %v550 = vsel %vm286, %v545, %v549
      %v552 = vshrl.u32 %v234, 16
      %v554 = vrot.slane %v552, 4
      %v555 = vshll.u32 %v234, 16
      %v557 = vrot.slane %v555, 5
      %v558 = vor.u32 %v554, %v557
      %v559 = vrot.slane %v558, 4
      %v561 = vshll.u32 %v235, 16
      %v563 = vrot.slane %v561, 5
      %v564 = vsel %vm286, %v559, %v563
      %v565 = vshrl.u32 %v235, 16
      %v567 = vrot.slane %v565, 4
      %v568 = vor.u32 %v567, %v563
      %v569 = vrot.slane %v568, 4
      %v571 = vshll.u32 %v259, 16
      %v573 = vrot.slane %v571, 5
      %v574 = vsel %vm286, %v569, %v573
      %v576 = vshrl.u32 %v236, 16
      %v578 = vrot.slane %v576, 4
      %v579 = vshll.u32 %v236, 16
      %v581 = vrot.slane %v579, 5
      %v582 = vor.u32 %v578, %v581
      %v583 = vrot.slane %v582, 4
      %v585 = vshll.u32 %v237, 16
      %v587 = vrot.slane %v585, 5
      %v588 = vsel %vm286, %v583, %v587
      %v589 = vshrl.u32 %v237, 16
      %v591 = vrot.slane %v589, 4
      %v592 = vor.u32 %v591, %v587
      %v593 = vrot.slane %v592, 4
      %v595 = vshll.u32 %v260, 16
      %v597 = vrot.slane %v595, 5
      %v598 = vsel %vm286, %v593, %v597
      %v600 = vshrl.u32 %v238, 16
      %v602 = vrot.slane %v600, 4
      %v603 = vshll.u32 %v238, 16
      %v605 = vrot.slane %v603, 5
      %v606 = vor.u32 %v602, %v605
      %v607 = vrot.slane %v606, 4
      %v609 = vshll.u32 %v239, 16
      %v611 = vrot.slane %v609, 5
      %v612 = vsel %vm286, %v607, %v611
      %v613 = vshrl.u32 %v239, 16
      %v615 = vrot.slane %v613, 4
      %v616 = vor.u32 %v615, %v611
      %v617 = vrot.slane %v616, 4
      %v619 = vshll.u32 %v261, 16
      %v621 = vrot.slane %v619, 5
      %v622 = vsel %vm286, %v617, %v621
      %v624 = vshrl.u32 %v240, 16
      %v626 = vrot.slane %v624, 4
      %v627 = vshll.u32 %v240, 16
      %v629 = vrot.slane %v627, 5
      %v630 = vor.u32 %v626, %v629
      %v631 = vrot.slane %v630, 4
      %v633 = vshll.u32 %v241, 16
      %v635 = vrot.slane %v633, 5
      %v636 = vsel %vm286, %v631, %v635
      %v637 = vshrl.u32 %v241, 16
      %v639 = vrot.slane %v637, 4
      %v640 = vor.u32 %v639, %v635
      %v641 = vrot.slane %v640, 4
      %v643 = vshll.u32 %v262, 16
      %v645 = vrot.slane %v643, 5
      %v646 = vsel %vm286, %v641, %v645
      %v648 = vshrl.u32 %v242, 16
      %v650 = vrot.slane %v648, 4
      %v651 = vshll.u32 %v242, 16
      %v653 = vrot.slane %v651, 5
      %v654 = vor.u32 %v650, %v653
      %v655 = vrot.slane %v654, 4
      %v657 = vshll.u32 %v243, 16
      %v659 = vrot.slane %v657, 5
      %v660 = vsel %vm286, %v655, %v659
      %v661 = vshrl.u32 %v243, 16
      %v663 = vrot.slane %v661, 4
      %v664 = vor.u32 %v663, %v659
      %v665 = vrot.slane %v664, 4
      %v667 = vshll.u32 %v263, 16
      %v669 = vrot.slane %v667, 5
      %v670 = vsel %vm286, %v665, %v669
      %vm719 = vcmask 1042432
      %vm720 = vcmask 1046532
      %vm721 = vmor %vm719, %vm720
      %v722 = vrot.slane %v266, 5
      %v723 = vrot.slane %v722, 4
      %v724 = vrot.slane %v213, 5
      %v725 = vsel %vm721, %v723, %v724
      %v726 = vrot.slane %v724, 4
      %v727 = vrot.slane %v248, 5
      %v728 = vsel %vm721, %v726, %v727
      %v729 = vrot.slane %v267, 5
      %v730 = vrot.slane %v729, 4
      %v731 = vrot.slane %v215, 5
      %v732 = vsel %vm721, %v730, %v731
      %v733 = vrot.slane %v731, 4
      %v734 = vrot.slane %v249, 5
      %v735 = vsel %vm721, %v733, %v734
      %v736 = vrot.slane %v268, 5
      %v737 = vrot.slane %v736, 4
      %v738 = vrot.slane %v217, 5
      %v739 = vsel %vm721, %v737, %v738
      %v740 = vrot.slane %v738, 4
      %v741 = vrot.slane %v250, 5
      %v742 = vsel %vm721, %v740, %v741
      %v743 = vrot.slane %v269, 5
      %v744 = vrot.slane %v743, 4
      %v745 = vrot.slane %v219, 5
      %v746 = vsel %vm721, %v744, %v745
      %v747 = vrot.slane %v745, 4
      %v748 = vrot.slane %v251, 5
      %v749 = vsel %vm721, %v747, %v748
      %v750 = vrot.slane %v270, 5
      %v751 = vrot.slane %v750, 4
      %v752 = vrot.slane %v221, 5
      %v753 = vsel %vm721, %v751, %v752
      %v754 = vrot.slane %v752, 4
      %v755 = vrot.slane %v252, 5
      %v756 = vsel %vm721, %v754, %v755
      %v757 = vrot.slane %v271, 5
      %v758 = vrot.slane %v757, 4
      %v759 = vrot.slane %v223, 5
      %v760 = vsel %vm721, %v758, %v759
      %v761 = vrot.slane %v759, 4
      %v762 = vrot.slane %v253, 5
      %v763 = vsel %vm721, %v761, %v762
      %v764 = vrot.slane %v272, 5
      %v765 = vrot.slane %v764, 4
      %v766 = vrot.slane %v225, 5
      %v767 = vsel %vm721, %v765, %v766
      %v768 = vrot.slane %v766, 4
      %v769 = vrot.slane %v254, 5
      %v770 = vsel %vm721, %v768, %v769
      %v771 = vrot.slane %v273, 5
      %v772 = vrot.slane %v771, 4
      %v773 = vrot.slane %v227, 5
      %v774 = vsel %vm721, %v772, %v773
      %v775 = vrot.slane %v773, 4
      %v776 = vrot.slane %v255, 5
      %v777 = vsel %vm721, %v775, %v776
      %v778 = vrot.slane %v274, 5
      %v779 = vrot.slane %v778, 4
      %v780 = vrot.slane %v229, 5
      %v781 = vsel %vm721, %v779, %v780
      %v782 = vrot.slane %v780, 4
      %v783 = vrot.slane %v256, 5
      %v784 = vsel %vm721, %v782, %v783
      %v785 = vrot.slane %v275, 5
      %v786 = vrot.slane %v785, 4
      %v787 = vrot.slane %v231, 5
      %v788 = vsel %vm721, %v786, %v787
      %v789 = vrot.slane %v787, 4
      %v790 = vrot.slane %v257, 5
      %v791 = vsel %vm721, %v789, %v790
      %v792 = vrot.slane %v276, 5
      %v793 = vrot.slane %v792, 4
      %v794 = vrot.slane %v233, 5
      %v795 = vsel %vm721, %v793, %v794
      %v796 = vrot.slane %v794, 4
      %v797 = vrot.slane %v258, 5
      %v798 = vsel %vm721, %v796, %v797
      %v799 = vrot.slane %v277, 5
      %v800 = vrot.slane %v799, 4
      %v801 = vrot.slane %v235, 5
      %v802 = vsel %vm721, %v800, %v801
      %v803 = vrot.slane %v801, 4
      %v804 = vrot.slane %v259, 5
      %v805 = vsel %vm721, %v803, %v804
      %v806 = vrot.slane %v278, 5
      %v807 = vrot.slane %v806, 4
      %v808 = vrot.slane %v237, 5
      %v809 = vsel %vm721, %v807, %v808
      %v810 = vrot.slane %v808, 4
      %v811 = vrot.slane %v260, 5
      %v812 = vsel %vm721, %v810, %v811
      %v813 = vrot.slane %v279, 5
      %v814 = vrot.slane %v813, 4
      %v815 = vrot.slane %v239, 5
      %v816 = vsel %vm721, %v814, %v815
      %v817 = vrot.slane %v815, 4
      %v818 = vrot.slane %v261, 5
      %v819 = vsel %vm721, %v817, %v818
      %v820 = vrot.slane %v280, 5
      %v821 = vrot.slane %v820, 4
      %v822 = vrot.slane %v241, 5
      %v823 = vsel %vm721, %v821, %v822
      %v824 = vrot.slane %v822, 4
      %v825 = vrot.slane %v262, 5
      %v826 = vsel %vm721, %v824, %v825
      %v827 = vrot.slane %v281, 5
      %v828 = vrot.slane %v827, 4
      %v829 = vrot.slane %v243, 5
      %v830 = vsel %vm721, %v828, %v829
      %v831 = vrot.slane %v829, 4
      %v832 = vrot.slane %v263, 5
      %v833 = vsel %vm721, %v831, %v832
      %v835 = vshrl.u32 %v244, 16
      %v837 = vrot.slane %v835, 4
      %v838 = vshll.u32 %v244, 16
      %v840 = vrot.slane %v838, 5
      %v841 = vor.u32 %v837, %v840
      %v842 = vrot.slane %v841, 4
      %v844 = vshll.u32 %v245, 16
      %v846 = vrot.slane %v844, 5
      %v847 = vsel %vm286, %v842, %v846
      %v848 = vshrl.u32 %v245, 16
      %v850 = vrot.slane %v848, 4
      %v851 = vor.u32 %v850, %v846
      %v852 = vrot.slane %v851, 4
      %v854 = vshll.u32 %v264, 16
      %v856 = vrot.slane %v854, 5
      %v857 = vsel %vm286, %v852, %v856
      %v861 = vrot.slane %v282, 5
      %v862 = vrot.slane %v861, 4
      %v863 = vrot.slane %v245, 5
      %v864 = vsel %vm721, %v862, %v863
      %v865 = vrot.slane %v863, 4
      %v866 = vrot.slane %v264, 5
      %v867 = vsel %vm721, %v865, %v866
      %v869 = vshrl.u32 %v246, 16
      %v871 = vrot.slane %v869, 4
      %v872 = vshll.u32 %v246, 16
      %v874 = vrot.slane %v872, 5
      %v875 = vor.u32 %v871, %v874
      %v876 = vrot.slane %v875, 4
      %v878 = vshll.u32 %v247, 16
      %v880 = vrot.slane %v878, 5
      %v881 = vsel %vm286, %v876, %v880
      %v882 = vshrl.u32 %v247, 16
      %v884 = vrot.slane %v882, 4
      %v885 = vor.u32 %v884, %v880
      %v886 = vrot.slane %v885, 4
      %v888 = vshll.u32 %v265, 16
      %v890 = vrot.slane %v888, 5
      %v891 = vsel %vm286, %v886, %v890
      %v895 = vrot.slane %v283, 5
      %v896 = vrot.slane %v895, 4
      %v897 = vrot.slane %v247, 5
      %v898 = vsel %vm721, %v896, %v897
      %v899 = vrot.slane %v897, 4
      %v900 = vrot.slane %v265, 5
      %v901 = vsel %vm721, %v899, %v900
      %v918 = vunpack.c.l.b16 %v212
      %v919 = vunpack.c.l.b16 %v213
      %v920 = vunpack.c.l.b16 %v214
      %v921 = vunpack.c.l.b16 %v215
      %v922 = vunpack.c.l.b16 %v216
      %v923 = vunpack.c.l.b16 %v217
      %v924 = vunpack.c.l.b16 %v218
      %v925 = vunpack.c.l.b16 %v219
      %v926 = vunpack.c.l.b16 %v220
      %v927 = vunpack.c.l.b16 %v221
      %v928 = vunpack.c.l.b16 %v222
      %v929 = vunpack.c.l.b16 %v223
      %v930 = vunpack.c.l.b16 %v224
      %v931 = vunpack.c.l.b16 %v225
      %v932 = vunpack.c.l.b16 %v226
      %v933 = vunpack.c.l.b16 %v227
      %v934 = vunpack.c.l.b16 %v228
      %v935 = vunpack.c.l.b16 %v229
      %v936 = vunpack.c.l.b16 %v230
      %v937 = vunpack.c.l.b16 %v231
      %v938 = vunpack.c.l.b16 %v232
      %v939 = vunpack.c.l.b16 %v233
      %v940 = vunpack.c.l.b16 %v234
      %v941 = vunpack.c.l.b16 %v235
      %v942 = vunpack.c.l.b16 %v236
      %v943 = vunpack.c.l.b16 %v237
      %v944 = vunpack.c.l.b16 %v238
      %v945 = vunpack.c.l.b16 %v239
      %v946 = vunpack.c.l.b16 %v240
      %v947 = vunpack.c.l.b16 %v241
      %v948 = vunpack.c.l.b16 %v242
      %v949 = vunpack.c.l.b16 %v243
      %v950 = vpack.c.b16 %v919, %v918
      %v951 = vpack.c.b16 %v921, %v920
      %v952 = vpack.c.b16 %v923, %v922
      %v953 = vpack.c.b16 %v925, %v924
      %v954 = vpack.c.b16 %v927, %v926
      %v955 = vpack.c.b16 %v929, %v928
      %v956 = vpack.c.b16 %v931, %v930
      %v957 = vpack.c.b16 %v933, %v932
      %v958 = vpack.c.b16 %v935, %v934
      %v959 = vpack.c.b16 %v937, %v936
      %v960 = vpack.c.b16 %v939, %v938
      %v961 = vpack.c.b16 %v941, %v940
      %v962 = vpack.c.b16 %v943, %v942
      %v963 = vpack.c.b16 %v945, %v944
      %v964 = vpack.c.b16 %v947, %v946
      %v965 = vpack.c.b16 %v949, %v948
      %v966 = vunpack.c.l.b16 %v300
      %v967 = vunpack.c.l.b16 %v310
      %v968 = vunpack.c.l.b16 %v324
      %v969 = vunpack.c.l.b16 %v334
      %v970 = vunpack.c.l.b16 %v348
      %v971 = vunpack.c.l.b16 %v358
      %v972 = vunpack.c.l.b16 %v372
      %v973 = vunpack.c.l.b16 %v382
      %v974 = vunpack.c.l.b16 %v396
      %v975 = vunpack.c.l.b16 %v406
      %v976 = vunpack.c.l.b16 %v420
      %v977 = vunpack.c.l.b16 %v430
      %v978 = vunpack.c.l.b16 %v444
      %v979 = vunpack.c.l.b16 %v454
      %v980 = vunpack.c.l.b16 %v468
      %v981 = vunpack.c.l.b16 %v478
      %v982 = vunpack.c.l.b16 %v492
      %v983 = vunpack.c.l.b16 %v502
      %v984 = vunpack.c.l.b16 %v516
      %v985 = vunpack.c.l.b16 %v526
      %v986 = vunpack.c.l.b16 %v540
      %v987 = vunpack.c.l.b16 %v550
      %v988 = vunpack.c.l.b16 %v564
      %v989 = vunpack.c.l.b16 %v574
      %v990 = vunpack.c.l.b16 %v588
      %v991 = vunpack.c.l.b16 %v598
      %v992 = vunpack.c.l.b16 %v612
      %v993 = vunpack.c.l.b16 %v622
      %v994 = vunpack.c.l.b16 %v636
      %v995 = vunpack.c.l.b16 %v646
      %v996 = vunpack.c.l.b16 %v660
      %v997 = vunpack.c.l.b16 %v670
      %v998 = vpack.c.b16 %v967, %v966
      %v999 = vpack.c.b16 %v969, %v968
      %v1000 = vpack.c.b16 %v971, %v970
      %v1001 = vpack.c.b16 %v973, %v972
      %v1002 = vpack.c.b16 %v975, %v974
      %v1003 = vpack.c.b16 %v977, %v976
      %v1004 = vpack.c.b16 %v979, %v978
      %v1005 = vpack.c.b16 %v981, %v980
      %v1006 = vpack.c.b16 %v983, %v982
      %v1007 = vpack.c.b16 %v985, %v984
      %v1008 = vpack.c.b16 %v987, %v986
      %v1009 = vpack.c.b16 %v989, %v988
      %v1010 = vpack.c.b16 %v991, %v990
      %v1011 = vpack.c.b16 %v993, %v992
      %v1012 = vpack.c.b16 %v995, %v994
      %v1013 = vpack.c.b16 %v997, %v996
      %1014 = vrot.lane.b32.xlu0 %v998, 4
      %v1015 = vpop.permute.xlu0 %1014
      %1016 = vrot.lane.b32.xlu0 %v999, 4
      %v1017 = vpop.permute.xlu0 %1016
      %1018 = vrot.lane.b32.xlu0 %v1000, 4
      %v1019 = vpop.permute.xlu0 %1018
      %1020 = vrot.lane.b32.xlu0 %v1001, 4
      %v1021 = vpop.permute.xlu0 %1020
      %1022 = vrot.lane.b32.xlu0 %v1002, 4
      %v1023 = vpop.permute.xlu0 %1022
      %1024 = vrot.lane.b32.xlu0 %v1003, 4
      %v1025 = vpop.permute.xlu0 %1024
      %1026 = vrot.lane.b32.xlu0 %v1004, 4
      %v1027 = vpop.permute.xlu0 %1026
      %1028 = vrot.lane.b32.xlu0 %v1005, 4
      %v1029 = vpop.permute.xlu0 %1028
      %1030 = vrot.lane.b32.xlu0 %v1006, 4
      %v1031 = vpop.permute.xlu0 %1030
      %1032 = vrot.lane.b32.xlu0 %v1007, 4
      %v1033 = vpop.permute.xlu0 %1032
      %1034 = vrot.lane.b32.xlu0 %v1008, 4
      %v1035 = vpop.permute.xlu0 %1034
      %1036 = vrot.lane.b32.xlu0 %v1009, 4
      %v1037 = vpop.permute.xlu0 %1036
      %1038 = vrot.lane.b32.xlu0 %v1010, 4
      %v1039 = vpop.permute.xlu0 %1038
      %1040 = vrot.lane.b32.xlu0 %v1011, 4
      %v1041 = vpop.permute.xlu0 %1040
      %1042 = vrot.lane.b32.xlu0 %v1012, 4
      %v1043 = vpop.permute.xlu0 %1042
      %1044 = vrot.lane.b32.xlu0 %v1013, 4
      %v1045 = vpop.permute.xlu0 %1044
      %v1047 = vunpack.c.l.b16 %v244
      %v1048 = vunpack.c.l.b16 %v245
      %v1049 = vpack.c.b16 %v1048, %v1047
      %1050 = vrot.lane.b32.xlu0 %v951, 8
      %v1051 = vpop.permute.xlu0 %1050
      %1052 = vrot.lane.b32.xlu0 %v952, 8
      %v1053 = vpop.permute.xlu0 %1052
      %1054 = vrot.lane.b32.xlu0 %v953, 8
      %v1055 = vpop.permute.xlu0 %1054
      %1056 = vrot.lane.b32.xlu0 %v954, 8
      %v1057 = vpop.permute.xlu0 %1056
      %1058 = vrot.lane.b32.xlu0 %v955, 8
      %v1059 = vpop.permute.xlu0 %1058
      %1060 = vrot.lane.b32.xlu0 %v956, 8
      %v1061 = vpop.permute.xlu0 %1060
      %1062 = vrot.lane.b32.xlu0 %v957, 8
      %v1063 = vpop.permute.xlu0 %1062
      %1064 = vrot.lane.b32.xlu0 %v958, 8
      %v1065 = vpop.permute.xlu0 %1064
      %1066 = vrot.lane.b32.xlu0 %v959, 8
      %v1067 = vpop.permute.xlu0 %1066
      %1068 = vrot.lane.b32.xlu0 %v960, 8
      %v1069 = vpop.permute.xlu0 %1068
      %1070 = vrot.lane.b32.xlu0 %v961, 8
      %v1071 = vpop.permute.xlu0 %1070
      %1072 = vrot.lane.b32.xlu0 %v962, 8
      %v1073 = vpop.permute.xlu0 %1072
      %1074 = vrot.lane.b32.xlu0 %v963, 8
      %v1075 = vpop.permute.xlu0 %1074
      %1076 = vrot.lane.b32.xlu0 %v964, 8
      %v1077 = vpop.permute.xlu0 %1076
      %1078 = vrot.lane.b32.xlu0 %v965, 8
      %v1079 = vpop.permute.xlu0 %1078
      %1080 = vrot.lane.b32.xlu0 %v1049, 8
      %v1081 = vpop.permute.xlu0 %1080
      %v1082 = vunpack.c.l.b16 %v847
      %v1083 = vunpack.c.l.b16 %v857
      %v1084 = vpack.c.b16 %v1083, %v1082
      %1085 = vrot.lane.b32.xlu0 %v999, 12
      %v1086 = vpop.permute.xlu0 %1085
      %1087 = vrot.lane.b32.xlu0 %v1000, 12
      %v1088 = vpop.permute.xlu0 %1087
      %1089 = vrot.lane.b32.xlu0 %v1001, 12
      %v1090 = vpop.permute.xlu0 %1089
      %1091 = vrot.lane.b32.xlu0 %v1002, 12
      %v1092 = vpop.permute.xlu0 %1091
      %1093 = vrot.lane.b32.xlu0 %v1003, 12
      %v1094 = vpop.permute.xlu0 %1093
      %1095 = vrot.lane.b32.xlu0 %v1004, 12
      %v1096 = vpop.permute.xlu0 %1095
      %1097 = vrot.lane.b32.xlu0 %v1005, 12
      %v1098 = vpop.permute.xlu0 %1097
      %1099 = vrot.lane.b32.xlu0 %v1006, 12
      %v1100 = vpop.permute.xlu0 %1099
      %1101 = vrot.lane.b32.xlu0 %v1007, 12
      %v1102 = vpop.permute.xlu0 %1101
      %1103 = vrot.lane.b32.xlu0 %v1008, 12
      %v1104 = vpop.permute.xlu0 %1103
      %1105 = vrot.lane.b32.xlu0 %v1009, 12
      %v1106 = vpop.permute.xlu0 %1105
      %1107 = vrot.lane.b32.xlu0 %v1010, 12
      %v1108 = vpop.permute.xlu0 %1107
      %1109 = vrot.lane.b32.xlu0 %v1011, 12
      %v1110 = vpop.permute.xlu0 %1109
      %1111 = vrot.lane.b32.xlu0 %v1012, 12
      %v1112 = vpop.permute.xlu0 %1111
      %1113 = vrot.lane.b32.xlu0 %v1013, 12
      %v1114 = vpop.permute.xlu0 %1113
      %1115 = vrot.lane.b32.xlu0 %v1084, 12
      %v1116 = vpop.permute.xlu0 %1115
      %vm1117 = vcmask 31744
      %v1120 = vsel %vm1117, %v950, %v1015
      %v1123 = vsel %vm1117, %v951, %v1017
      %v1126 = vsel %vm1117, %v952, %v1019
      %v1129 = vsel %vm1117, %v953, %v1021
      %v1132 = vsel %vm1117, %v954, %v1023
      %v1135 = vsel %vm1117, %v955, %v1025
      %v1138 = vsel %vm1117, %v956, %v1027
      %v1141 = vsel %vm1117, %v957, %v1029
      %v1144 = vsel %vm1117, %v958, %v1031
      %v1147 = vsel %vm1117, %v959, %v1033
      %v1150 = vsel %vm1117, %v960, %v1035
      %v1153 = vsel %vm1117, %v961, %v1037
      %v1156 = vsel %vm1117, %v962, %v1039
      %v1159 = vsel %vm1117, %v963, %v1041
      %v1162 = vsel %vm1117, %v964, %v1043
      %v1165 = vsel %vm1117, %v965, %v1045
      %vm1166 = vcmask 64512
      %v1168 = vsel %vm1166, %v1120, %v1051
      %v1170 = vsel %vm1166, %v1123, %v1053
      %v1172 = vsel %vm1166, %v1126, %v1055
      %v1174 = vsel %vm1166, %v1129, %v1057
      %v1176 = vsel %vm1166, %v1132, %v1059
      %v1178 = vsel %vm1166, %v1135, %v1061
      %v1180 = vsel %vm1166, %v1138, %v1063
      %v1182 = vsel %vm1166, %v1141, %v1065
      %v1184 = vsel %vm1166, %v1144, %v1067
      %v1186 = vsel %vm1166, %v1147, %v1069
      %v1188 = vsel %vm1166, %v1150, %v1071
      %v1190 = vsel %vm1166, %v1153, %v1073
      %v1192 = vsel %vm1166, %v1156, %v1075
      %v1194 = vsel %vm1166, %v1159, %v1077
      %v1196 = vsel %vm1166, %v1162, %v1079
      %v1198 = vsel %vm1166, %v1165, %v1081
      %vm1199 = vcmask 97280
      %v1201 = vsel %vm1199, %v1168, %v1086
      %v1203 = vsel %vm1199, %v1170, %v1088
      %v1205 = vsel %vm1199, %v1172, %v1090
      %v1207 = vsel %vm1199, %v1174, %v1092
      %v1209 = vsel %vm1199, %v1176, %v1094
      %v1211 = vsel %vm1199, %v1178, %v1096
      %v1213 = vsel %vm1199, %v1180, %v1098
      %v1215 = vsel %vm1199, %v1182, %v1100
      %v1217 = vsel %vm1199, %v1184, %v1102
      %v1219 = vsel %vm1199, %v1186, %v1104
      %v1221 = vsel %vm1199, %v1188, %v1106
      %v1223 = vsel %vm1199, %v1190, %v1108
      %v1225 = vsel %vm1199, %v1192, %v1110
      %v1227 = vsel %vm1199, %v1194, %v1112
      %v1229 = vsel %vm1199, %v1196, %v1114
      %v1231 = vsel %vm1199, %v1198, %v1116
      %v1232 = vld [vmem:[%s2] sm:$0xf]
      %v1233 = vld [vmem:[%s2 + $0x4] sm:$0xf]
      %v1235 = vlaneseq
      %v1236 = vshrl.u32 %v1235, 7
      %v1237 = vsub.s32 0, %v1236
      %v1238 = vrot.slane %v211, %v1237
      %v1242 = vunpack.c.l.b16 %v1232
      %v1243 = vunpack.c.l.b16 %v1233
      %v1244 = vpack.c.b16 %v1243, %v1242
      %vm1246 = vcmask 130048
      %v1247 = vsel %vm1246, %v1201, 0
      %v1249 = vsel %vm1246, %v1203, 0
      %v1251 = vsel %vm1246, %v1205, 0
      %v1253 = vsel %vm1246, %v1207, 0
      %v1255 = vsel %vm1246, %v1209, 0
      %v1257 = vsel %vm1246, %v1211, 0
      %v1259 = vsel %vm1246, %v1213, 0
      %v1261 = vsel %vm1246, %v1215, 0
      %v1263 = vsel %vm1246, %v1217, 0
      %v1265 = vsel %vm1246, %v1219, 0
      %v1267 = vsel %vm1246, %v1221, 0
      %v1269 = vsel %vm1246, %v1223, 0
      %v1271 = vsel %vm1246, %v1225, 0
      %v1273 = vsel %vm1246, %v1227, 0
      %v1275 = vsel %vm1246, %v1229, 0
      %v1277 = vsel %vm1246, %v1231, 0
      %1279 = vmatprep.subr.bf16.mxu0 0
      %1280 = vmatpush1.bf16.msra.mxu0 %v1244
      %1281 = vmatprep.subr.bf16.mxu0 0
      %1282 = vmatpush1.bf16.msra.mxu0 0
      %1283 = vmatprep.subr.bf16.mxu0 0
      %1284 = vmatpush1.bf16.msra.mxu0 0
      %1285 = vmatprep.subr.bf16.mxu0 0
      %1286 = vmatpush1.bf16.msra.mxu0 0
      %1287 = vmatprep.subr.bf16.mxu0 0
      %1288 = vmatpush1.bf16.msra.mxu0 0
      %1289 = vmatprep.subr.bf16.mxu0 0
      %1290 = vmatpush1.bf16.msra.mxu0 0
      %1291 = vmatprep.subr.bf16.mxu0 0
      %1292 = vmatpush1.bf16.msra.mxu0 0
      %1293 = vmatprep.subr.bf16.mxu0 0
      %1294 = vmatpush1.bf16.msra.mxu0 0
      %1295 = vmatprep.subr.bf16.mxu0 0
      %1296 = vmatpush1.bf16.msra.mxu0 0
      %1297 = vmatprep.subr.bf16.mxu0 0
      %1298 = vmatpush1.bf16.msra.mxu0 0
      %1299 = vmatprep.subr.bf16.mxu0 0
      %1300 = vmatpush1.bf16.msra.mxu0 0
      %1301 = vmatprep.subr.bf16.mxu0 0
      %1302 = vmatpush1.bf16.msra.mxu0 0
      %1303 = vmatprep.subr.bf16.mxu0 0
      %1304 = vmatpush1.bf16.msra.mxu0 0
      %1305 = vmatprep.subr.bf16.mxu0 0
      %1306 = vmatpush1.bf16.msra.mxu0 0
      %1307 = vmatprep.subr.bf16.mxu0 0
      %1308 = vmatpush1.bf16.msra.mxu0 0
      %1309 = vmatprep.subr.bf16.mxu0 0
      %1310 = vmatpush1.bf16.msra.mxu0 0
      %1311 = vmatprep.mubr.bf16.mxu0 0
      %1312 = vmatmul.mubr.bf16.gmra.mrb[0].mxu0 %v1247
      %v1313 = vpop.f32.mrb[0].mxu0
      %v1314 = vadd.f32 %v1238, %v1313
      %v1315 = vpop.f32.mrb[0].mxu0
      %v1316 = vpop.f32.mrb[0].mxu0
      %v1317 = vadd.f32 %v1238, %v1316
      %v1318 = vpop.f32.mrb[0].mxu0
      %1319 = vmatprep.mubr.bf16.mxu0 0
      %1320 = vmatmul.mubr.bf16.gmra.mrb[0].mxu0 %v1249
      %v1321 = vpop.f32.mrb[0].mxu0
      %v1322 = vadd.f32 %v1238, %v1321
      %v1323 = vpop.f32.mrb[0].mxu0
      %v1324 = vpop.f32.mrb[0].mxu0
      %v1325 = vadd.f32 %v1238, %v1324
      %v1326 = vpop.f32.mrb[0].mxu0
      %1327 = vmatprep.mubr.bf16.mxu0 0
      %1328 = vmatmul.mubr.bf16.gmra.mrb[0].mxu0 %v1251
      %v1329 = vpop.f32.mrb[0].mxu0
      %v1330 = vadd.f32 %v1238, %v1329
      %v1331 = vpop.f32.mrb[0].mxu0
      %v1332 = vpop.f32.mrb[0].mxu0
      %v1333 = vadd.f32 %v1238, %v1332
      %v1334 = vpop.f32.mrb[0].mxu0
      %1335 = vmatprep.mubr.bf16.mxu0 0
      %1336 = vmatmul.mubr.bf16.gmra.mrb[0].mxu0 %v1253
      %v1337 = vpop.f32.mrb[0].mxu0
      %v1338 = vadd.f32 %v1238, %v1337
      %v1339 = vpop.f32.mrb[0].mxu0
      %v1340 = vpop.f32.mrb[0].mxu0
      %v1341 = vadd.f32 %v1238, %v1340
      %v1342 = vpop.f32.mrb[0].mxu0
      %1343 = vmatprep.mubr.bf16.mxu0 0
      %1344 = vmatmul.mubr.bf16.gmra.mrb[0].mxu0 %v1255
      %v1345 = vpop.f32.mrb[0].mxu0
      %v1346 = vadd.f32 %v1238, %v1345
      %v1347 = vpop.f32.mrb[0].mxu0
      %v1348 = vpop.f32.mrb[0].mxu0
      %v1349 = vadd.f32 %v1238, %v1348
      %v1350 = vpop.f32.mrb[0].mxu0
      %1351 = vmatprep.mubr.bf16.mxu0 0
      %1352 = vmatmul.mubr.bf16.gmra.mrb[0].mxu0 %v1257
      %v1353 = vpop.f32.mrb[0].mxu0
      %v1354 = vadd.f32 %v1238, %v1353
      %v1355 = vpop.f32.mrb[0].mxu0
      %v1356 = vpop.f32.mrb[0].mxu0
      %v1357 = vadd.f32 %v1238, %v1356
      %v1358 = vpop.f32.mrb[0].mxu0
      %1359 = vmatprep.mubr.bf16.mxu0 0
      %1360 = vmatmul.mubr.bf16.gmra.mrb[0].mxu0 %v1259
      %v1361 = vpop.f32.mrb[0].mxu0
      %v1362 = vadd.f32 %v1238, %v1361
      %v1363 = vpop.f32.mrb[0].mxu0
      %v1364 = vpop.f32.mrb[0].mxu0
      %v1365 = vadd.f32 %v1238, %v1364
      %v1366 = vpop.f32.mrb[0].mxu0
      %1367 = vmatprep.mubr.bf16.mxu0 0
      %1368 = vmatmul.mubr.bf16.gmra.mrb[0].mxu0 %v1261
      %v1369 = vpop.f32.mrb[0].mxu0
      %v1370 = vadd.f32 %v1238, %v1369
      %v1371 = vpop.f32.mrb[0].mxu0
      %v1372 = vpop.f32.mrb[0].mxu0
      %v1373 = vadd.f32 %v1238, %v1372
      %v1374 = vpop.f32.mrb[0].mxu0
      %1375 = vmatprep.mubr.bf16.mxu0 0
      %1376 = vmatmul.mubr.bf16.gmra.mrb[0].mxu0 %v1263
      %v1377 = vpop.f32.mrb[0].mxu0
      %v1378 = vadd.f32 %v1238, %v1377
      %v1379 = vpop.f32.mrb[0].mxu0
      %v1380 = vpop.f32.mrb[0].mxu0
      %v1381 = vadd.f32 %v1238, %v1380
      %v1382 = vpop.f32.mrb[0].mxu0
      %1383 = vmatprep.mubr.bf16.mxu0 0
      %1384 = vmatmul.mubr.bf16.gmra.mrb[0].mxu0 %v1265
      %v1385 = vpop.f32.mrb[0].mxu0
      %v1386 = vadd.f32 %v1238, %v1385
      %v1387 = vpop.f32.mrb[0].mxu0
      %v1388 = vpop.f32.mrb[0].mxu0
      %v1389 = vadd.f32 %v1238, %v1388
      %v1390 = vpop.f32.mrb[0].mxu0
      %1391 = vmatprep.mubr.bf16.mxu0 0
      %1392 = vmatmul.mubr.bf16.gmra.mrb[0].mxu0 %v1267
      %v1393 = vpop.f32.mrb[0].mxu0
      %v1394 = vadd.f32 %v1238, %v1393
      %v1395 = vpop.f32.mrb[0].mxu0
      %v1396 = vpop.f32.mrb[0].mxu0
      %v1397 = vadd.f32 %v1238, %v1396
      %v1398 = vpop.f32.mrb[0].mxu0
      %1399 = vmatprep.mubr.bf16.mxu0 0
      %1400 = vmatmul.mubr.bf16.gmra.mrb[0].mxu0 %v1269
      %v1401 = vpop.f32.mrb[0].mxu0
      %v1402 = vadd.f32 %v1238, %v1401
      %v1403 = vpop.f32.mrb[0].mxu0
      %v1404 = vpop.f32.mrb[0].mxu0
      %v1405 = vadd.f32 %v1238, %v1404
      %v1406 = vpop.f32.mrb[0].mxu0
      %1407 = vmatprep.mubr.bf16.mxu0 0
      %1408 = vmatmul.mubr.bf16.gmra.mrb[0].mxu0 %v1271
      %v1409 = vpop.f32.mrb[0].mxu0
      %v1410 = vadd.f32 %v1238, %v1409
      %v1411 = vpop.f32.mrb[0].mxu0
      %v1412 = vpop.f32.mrb[0].mxu0
      %v1413 = vadd.f32 %v1238, %v1412
      %v1414 = vpop.f32.mrb[0].mxu0
      %1415 = vmatprep.mubr.bf16.mxu0 0
      %1416 = vmatmul.mubr.bf16.gmra.mrb[0].mxu0 %v1273
      %v1417 = vpop.f32.mrb[0].mxu0
      %v1418 = vadd.f32 %v1238, %v1417
      %v1419 = vpop.f32.mrb[0].mxu0
      %v1420 = vpop.f32.mrb[0].mxu0
      %v1421 = vadd.f32 %v1238, %v1420
      %v1422 = vpop.f32.mrb[0].mxu0
      %1423 = vmatprep.mubr.bf16.mxu0 0
      %1424 = vmatmul.mubr.bf16.gmra.mrb[0].mxu0 %v1275
      %v1425 = vpop.f32.mrb[0].mxu0
      %v1426 = vadd.f32 %v1238, %v1425
      %v1427 = vpop.f32.mrb[0].mxu0
      %v1428 = vpop.f32.mrb[0].mxu0
      %v1429 = vadd.f32 %v1238, %v1428
      %v1430 = vpop.f32.mrb[0].mxu0
      %1431 = vmatprep.mubr.bf16.mxu0 0
      %1432 = vmatmul.mubr.bf16.gmra.mrb[0].mxu0 %v1277
      %v1433 = vpop.f32.mrb[0].mxu0
      %v1434 = vadd.f32 %v1238, %v1433
      %v1435 = vpop.f32.mrb[0].mxu0
      %v1436 = vpop.f32.mrb[0].mxu0
      %v1437 = vadd.f32 %v1238, %v1436
      %v1438 = vpop.f32.mrb[0].mxu0
      %1439 = vdwg.mxu0
      %vm1440 = vcmp.ge.f32.partialorder %v1314, 0.0
      %vm1441 = vcmp.ge.f32.partialorder %v1317, 0.0
      %vm1442 = vcmp.ge.f32.partialorder %v1322, 0.0
      %vm1443 = vcmp.ge.f32.partialorder %v1325, 0.0
      %vm1444 = vcmp.ge.f32.partialorder %v1330, 0.0
      %vm1445 = vcmp.ge.f32.partialorder %v1333, 0.0
      %vm1446 = vcmp.ge.f32.partialorder %v1338, 0.0
      %vm1447 = vcmp.ge.f32.partialorder %v1341, 0.0
      %vm1448 = vcmp.ge.f32.partialorder %v1346, 0.0
      %vm1449 = vcmp.ge.f32.partialorder %v1349, 0.0
      %vm1450 = vcmp.ge.f32.partialorder %v1354, 0.0
      %vm1451 = vcmp.ge.f32.partialorder %v1357, 0.0
      %vm1452 = vcmp.ge.f32.partialorder %v1362, 0.0
      %vm1453 = vcmp.ge.f32.partialorder %v1365, 0.0
      %vm1454 = vcmp.ge.f32.partialorder %v1370, 0.0
      %vm1455 = vcmp.ge.f32.partialorder %v1373, 0.0
      %vm1456 = vcmp.ge.f32.partialorder %v1378, 0.0
      %vm1457 = vcmp.ge.f32.partialorder %v1381, 0.0
      %vm1458 = vcmp.ge.f32.partialorder %v1386, 0.0
      %vm1459 = vcmp.ge.f32.partialorder %v1389, 0.0
      %vm1460 = vcmp.ge.f32.partialorder %v1394, 0.0
      %vm1461 = vcmp.ge.f32.partialorder %v1397, 0.0
      %vm1462 = vcmp.ge.f32.partialorder %v1402, 0.0
      %vm1463 = vcmp.ge.f32.partialorder %v1405, 0.0
      %vm1464 = vcmp.ge.f32.partialorder %v1410, 0.0
      %vm1465 = vcmp.ge.f32.partialorder %v1413, 0.0
      %vm1466 = vcmp.ge.f32.partialorder %v1418, 0.0
      %vm1467 = vcmp.ge.f32.partialorder %v1421, 0.0
      %vm1468 = vcmp.ge.f32.partialorder %v1426, 0.0
      %vm1469 = vcmp.ge.f32.partialorder %v1429, 0.0
      %vm1470 = vcmp.ge.f32.partialorder %v1434, 0.0
      %vm1471 = vcmp.ge.f32.partialorder %v1437, 0.0
      %v1472 = vstv %s210
      %v1473 = vmul.f32 %v1472, %v1314
      %v1474 = vmul.f32 %v1472, %v1317
      %v1475 = vmul.f32 %v1472, %v1322
      %v1476 = vmul.f32 %v1472, %v1325
      %v1477 = vmul.f32 %v1472, %v1330
      %v1478 = vmul.f32 %v1472, %v1333
      %v1479 = vmul.f32 %v1472, %v1338
      %v1480 = vmul.f32 %v1472, %v1341
      %v1481 = vmul.f32 %v1472, %v1346
      %v1482 = vmul.f32 %v1472, %v1349
      %v1483 = vmul.f32 %v1472, %v1354
      %v1484 = vmul.f32 %v1472, %v1357
      %v1485 = vmul.f32 %v1472, %v1362
      %v1486 = vmul.f32 %v1472, %v1365
      %v1487 = vmul.f32 %v1472, %v1370
      %v1488 = vmul.f32 %v1472, %v1373
      %v1489 = vmul.f32 %v1472, %v1378
      %v1490 = vmul.f32 %v1472, %v1381
      %v1491 = vmul.f32 %v1472, %v1386
      %v1492 = vmul.f32 %v1472, %v1389
      %v1493 = vmul.f32 %v1472, %v1394
      %v1494 = vmul.f32 %v1472, %v1397
      %v1495 = vmul.f32 %v1472, %v1402
      %v1496 = vmul.f32 %v1472, %v1405
      %v1497 = vmul.f32 %v1472, %v1410
      %v1498 = vmul.f32 %v1472, %v1413
      %v1499 = vmul.f32 %v1472, %v1418
      %v1500 = vmul.f32 %v1472, %v1421
      %v1501 = vmul.f32 %v1472, %v1426
      %v1502 = vmul.f32 %v1472, %v1429
      %v1503 = vmul.f32 %v1472, %v1434
      %v1504 = vmul.f32 %v1472, %v1437
      %v1505 = vsel %vm1440, %v1314, %v1473
      %v1506 = vsel %vm1441, %v1317, %v1474
      %v1507 = vsel %vm1442, %v1322, %v1475
      %v1508 = vsel %vm1443, %v1325, %v1476
      %v1509 = vsel %vm1444, %v1330, %v1477
      %v1510 = vsel %vm1445, %v1333, %v1478
      %v1511 = vsel %vm1446, %v1338, %v1479
      %v1512 = vsel %vm1447, %v1341, %v1480
      %v1513 = vsel %vm1448, %v1346, %v1481
      %v1514 = vsel %vm1449, %v1349, %v1482
      %v1515 = vsel %vm1450, %v1354, %v1483
      %v1516 = vsel %vm1451, %v1357, %v1484
      %v1517 = vsel %vm1452, %v1362, %v1485
      %v1518 = vsel %vm1453, %v1365, %v1486
      %v1519 = vsel %vm1454, %v1370, %v1487
      %v1520 = vsel %vm1455, %v1373, %v1488
      %v1521 = vsel %vm1456, %v1378, %v1489
      %v1522 = vsel %vm1457, %v1381, %v1490
      %v1523 = vsel %vm1458, %v1386, %v1491
      %v1524 = vsel %vm1459, %v1389, %v1492
      %v1525 = vsel %vm1460, %v1394, %v1493
      %v1526 = vsel %vm1461, %v1397, %v1494
      %v1527 = vsel %vm1462, %v1402, %v1495
      %v1528 = vsel %vm1463, %v1405, %v1496
      %v1529 = vsel %vm1464, %v1410, %v1497
      %v1530 = vsel %vm1465, %v1413, %v1498
      %v1531 = vsel %vm1466, %v1418, %v1499
      %v1532 = vsel %vm1467, %v1421, %v1500
      %v1533 = vsel %vm1468, %v1426, %v1501
      %v1534 = vsel %vm1469, %v1429, %v1502
      %v1535 = vsel %vm1470, %v1434, %v1503
      %v1536 = vsel %vm1471, %v1437, %v1504
      %v1537 = vpack.c.bf16 %v1506, %v1505
      %v1538 = vpack.c.bf16 %v1508, %v1507
      %v1539 = vpack.c.bf16 %v1510, %v1509
      %v1540 = vpack.c.bf16 %v1512, %v1511
      %v1541 = vpack.c.bf16 %v1514, %v1513
      %v1542 = vpack.c.bf16 %v1516, %v1515
      %v1543 = vpack.c.bf16 %v1518, %v1517
      %v1544 = vpack.c.bf16 %v1520, %v1519
      %v1545 = vpack.c.bf16 %v1522, %v1521
      %v1546 = vpack.c.bf16 %v1524, %v1523
      %v1547 = vpack.c.bf16 %v1526, %v1525
      %v1548 = vpack.c.bf16 %v1528, %v1527
      %v1549 = vpack.c.bf16 %v1530, %v1529
      %v1550 = vpack.c.bf16 %v1532, %v1531
      %v1551 = vpack.c.bf16 %v1534, %v1533
      %v1552 = vpack.c.bf16 %v1536, %v1535
      %v1569 = vunpack.c.l.b16 %v1537
      %v1570 = vunpack.c.h.b16 %v1537
      %v1571 = vunpack.c.l.b16 %v1538
      %v1572 = vunpack.c.h.b16 %v1538
      %v1573 = vunpack.c.l.b16 %v1539
      %v1574 = vunpack.c.h.b16 %v1539
      %v1575 = vunpack.c.l.b16 %v1540
      %v1576 = vunpack.c.h.b16 %v1540
      %v1577 = vunpack.c.l.b16 %v1541
      %v1578 = vunpack.c.h.b16 %v1541
      %v1579 = vunpack.c.l.b16 %v1542
      %v1580 = vunpack.c.h.b16 %v1542
      %v1581 = vunpack.c.l.b16 %v1543
      %v1582 = vunpack.c.h.b16 %v1543
      %v1583 = vunpack.c.l.b16 %v1544
      %v1584 = vunpack.c.h.b16 %v1544
      %v1585 = vunpack.c.l.b16 %v1545
      %v1586 = vunpack.c.h.b16 %v1545
      %v1587 = vunpack.c.l.b16 %v1546
      %v1588 = vunpack.c.h.b16 %v1546
      %v1589 = vunpack.c.l.b16 %v1547
      %v1590 = vunpack.c.h.b16 %v1547
      %v1591 = vunpack.c.l.b16 %v1548
      %v1592 = vunpack.c.h.b16 %v1548
      %v1593 = vunpack.c.l.b16 %v1549
      %v1594 = vunpack.c.h.b16 %v1549
      %v1595 = vunpack.c.l.b16 %v1550
      %v1596 = vunpack.c.h.b16 %v1550
      %v1597 = vunpack.c.l.b16 %v1551
      %v1598 = vunpack.c.h.b16 %v1551
      %v1599 = vunpack.c.l.b16 %v1552
      %v1600 = vunpack.c.h.b16 %v1552
      %v1601 = vpack.c.b16 %v1569, %v1569
      %v1602 = vpack.c.b16 %v1570, %v1570
      %v1603 = vpack.c.b16 %v1571, %v1571
      %v1604 = vpack.c.b16 %v1572, %v1572
      %v1605 = vpack.c.b16 %v1573, %v1573
      %v1606 = vpack.c.b16 %v1574, %v1574
      %v1607 = vpack.c.b16 %v1575, %v1575
      %v1608 = vpack.c.b16 %v1576, %v1576
      %v1609 = vpack.c.b16 %v1577, %v1577
      %v1610 = vpack.c.b16 %v1578, %v1578
      %v1611 = vpack.c.b16 %v1579, %v1579
      %v1612 = vpack.c.b16 %v1580, %v1580
      %v1613 = vpack.c.b16 %v1581, %v1581
      %v1614 = vpack.c.b16 %v1582, %v1582
      %v1615 = vpack.c.b16 %v1583, %v1583
      %v1616 = vpack.c.b16 %v1584, %v1584
      %v1617 = vpack.c.b16 %v1585, %v1585
      %v1618 = vpack.c.b16 %v1586, %v1586
      %v1619 = vpack.c.b16 %v1587, %v1587
      %v1620 = vpack.c.b16 %v1588, %v1588
      %v1621 = vpack.c.b16 %v1589, %v1589
      %v1622 = vpack.c.b16 %v1590, %v1590
      %v1623 = vpack.c.b16 %v1591, %v1591
      %v1624 = vpack.c.b16 %v1592, %v1592
      %v1625 = vpack.c.b16 %v1593, %v1593
      %v1626 = vpack.c.b16 %v1594, %v1594
      %v1627 = vpack.c.b16 %v1595, %v1595
      %v1628 = vpack.c.b16 %v1596, %v1596
      %v1629 = vpack.c.b16 %v1597, %v1597
      %v1630 = vpack.c.b16 %v1598, %v1598
      %v1631 = vpack.c.b16 %v1599, %v1599
      %v1632 = vpack.c.b16 %v1600, %v1600
      %1665 = vst [vmem:[%s208] sm:$0xf] %v1601
      %1666 = vst [vmem:[%s208 + $0x4] sm:$0xf] %v1602
      %1667 = vst [vmem:[%s208 + $0x8] sm:$0xf] %v1603
      %1668 = vst [vmem:[%s208 + $0xc] sm:$0xf] %v1604
      %1669 = vst [vmem:[%s208 + $0x10] sm:$0xf] %v1605
      %1670 = vst [vmem:[%s208 + $0x14] sm:$0xf] %v1606
      %1671 = vst [vmem:[%s208 + $0x18] sm:$0xf] %v1607
      %1672 = vst [vmem:[%s208 + $0x1c] sm:$0xf] %v1608
      %1673 = vst [vmem:[%s208 + $0x20] sm:$0xf] %v1609
      %1674 = vst [vmem:[%s208 + $0x24] sm:$0xf] %v1610
      %1675 = vst [vmem:[%s208 + $0x28] sm:$0xf] %v1611
      %1676 = vst [vmem:[%s208 + $0x2c] sm:$0xf] %v1612
      %1677 = vst [vmem:[%s208 + $0x30] sm:$0xf] %v1613
      %1678 = vst [vmem:[%s208 + $0x34] sm:$0xf] %v1614
      %1679 = vst [vmem:[%s208 + $0x38] sm:$0xf] %v1615
      %1680 = vst [vmem:[%s208 + $0x3c] sm:$0xf] %v1616
      %1681 = vst [vmem:[%s208 + $0x40] sm:$0xf] %v1617
      %1682 = vst [vmem:[%s208 + $0x44] sm:$0xf] %v1618
      %1683 = vst [vmem:[%s208 + $0x48] sm:$0xf] %v1619
      %1684 = vst [vmem:[%s208 + $0x4c] sm:$0xf] %v1620
      %1685 = vst [vmem:[%s208 + $0x50] sm:$0xf] %v1621
      %1686 = vst [vmem:[%s208 + $0x54] sm:$0xf] %v1622
      %1687 = vst [vmem:[%s208 + $0x58] sm:$0xf] %v1623
      %1688 = vst [vmem:[%s208 + $0x5c] sm:$0xf] %v1624
      %1689 = vst [vmem:[%s208 + $0x60] sm:$0xf] %v1625
      %1690 = vst [vmem:[%s208 + $0x64] sm:$0xf] %v1626
      %1691 = vst [vmem:[%s208 + $0x68] sm:$0xf] %v1627
      %1692 = vst [vmem:[%s208 + $0x6c] sm:$0xf] %v1628
      %1693 = vst [vmem:[%s208 + $0x70] sm:$0xf] %v1629
      %1694 = vst [vmem:[%s208 + $0x74] sm:$0xf] %v1630
      %1695 = vst [vmem:[%s208 + $0x78] sm:$0xf] %v1631
      %1696 = vst [vmem:[%s208 + $0x7c] sm:$0xf] %v1632
      %v1697 = vunpack.c.l.b16 %v725
      %v1698 = vunpack.c.l.b16 %v728
      %v1699 = vunpack.c.l.b16 %v732
      %v1700 = vunpack.c.l.b16 %v735
      %v1701 = vunpack.c.l.b16 %v739
      %v1702 = vunpack.c.l.b16 %v742
      %v1703 = vunpack.c.l.b16 %v746
      %v1704 = vunpack.c.l.b16 %v749
      %v1705 = vunpack.c.l.b16 %v753
      %v1706 = vunpack.c.l.b16 %v756
      %v1707 = vunpack.c.l.b16 %v760
      %v1708 = vunpack.c.l.b16 %v763
      %v1709 = vunpack.c.l.b16 %v767
      %v1710 = vunpack.c.l.b16 %v770
      %v1711 = vunpack.c.l.b16 %v774
      %v1712 = vunpack.c.l.b16 %v777
      %v1713 = vunpack.c.l.b16 %v781
      %v1714 = vunpack.c.l.b16 %v784
      %v1715 = vunpack.c.l.b16 %v788
      %v1716 = vunpack.c.l.b16 %v791
      %v1717 = vunpack.c.l.b16 %v795
      %v1718 = vunpack.c.l.b16 %v798
      %v1719 = vunpack.c.l.b16 %v802
      %v1720 = vunpack.c.l.b16 %v805
      %v1721 = vunpack.c.l.b16 %v809
      %v1722 = vunpack.c.l.b16 %v812
      %v1723 = vunpack.c.l.b16 %v816
      %v1724 = vunpack.c.l.b16 %v819
      %v1725 = vunpack.c.l.b16 %v823
      %v1726 = vunpack.c.l.b16 %v826
      %v1727 = vunpack.c.l.b16 %v830
      %v1728 = vunpack.c.l.b16 %v833
      %v1729 = vpack.c.b16 %v1698, %v1697
      %v1730 = vpack.c.b16 %v1700, %v1699
      %v1731 = vpack.c.b16 %v1702, %v1701
      %v1732 = vpack.c.b16 %v1704, %v1703
      %v1733 = vpack.c.b16 %v1706, %v1705
      %v1734 = vpack.c.b16 %v1708, %v1707
      %v1735 = vpack.c.b16 %v1710, %v1709
      %v1736 = vpack.c.b16 %v1712, %v1711
      %v1737 = vpack.c.b16 %v1714, %v1713
      %v1738 = vpack.c.b16 %v1716, %v1715
      %v1739 = vpack.c.b16 %v1718, %v1717
      %v1740 = vpack.c.b16 %v1720, %v1719
      %v1741 = vpack.c.b16 %v1722, %v1721
      %v1742 = vpack.c.b16 %v1724, %v1723
      %v1743 = vpack.c.b16 %v1726, %v1725
      %v1744 = vpack.c.b16 %v1728, %v1727
      %1745 = vrot.lane.b32.xlu0 %v1729, 4
      %v1746 = vpop.permute.xlu0 %1745
      %1747 = vrot.lane.b32.xlu0 %v1730, 4
      %v1748 = vpop.permute.xlu0 %1747
      %1749 = vrot.lane.b32.xlu0 %v1731, 4
      %v1750 = vpop.permute.xlu0 %1749
      %1751 = vrot.lane.b32.xlu0 %v1732, 4
      %v1752 = vpop.permute.xlu0 %1751
      %1753 = vrot.lane.b32.xlu0 %v1733, 4
      %v1754 = vpop.permute.xlu0 %1753
      %1755 = vrot.lane.b32.xlu0 %v1734, 4
      %v1756 = vpop.permute.xlu0 %1755
      %1757 = vrot.lane.b32.xlu0 %v1735, 4
      %v1758 = vpop.permute.xlu0 %1757
      %1759 = vrot.lane.b32.xlu0 %v1736, 4
      %v1760 = vpop.permute.xlu0 %1759
      %1761 = vrot.lane.b32.xlu0 %v1737, 4
      %v1762 = vpop.permute.xlu0 %1761
      %1763 = vrot.lane.b32.xlu0 %v1738, 4
      %v1764 = vpop.permute.xlu0 %1763
      %1765 = vrot.lane.b32.xlu0 %v1739, 4
      %v1766 = vpop.permute.xlu0 %1765
      %1767 = vrot.lane.b32.xlu0 %v1740, 4
      %v1768 = vpop.permute.xlu0 %1767
      %1769 = vrot.lane.b32.xlu0 %v1741, 4
      %v1770 = vpop.permute.xlu0 %1769
      %1771 = vrot.lane.b32.xlu0 %v1742, 4
      %v1772 = vpop.permute.xlu0 %1771
      %1773 = vrot.lane.b32.xlu0 %v1743, 4
      %v1774 = vpop.permute.xlu0 %1773
      %1775 = vrot.lane.b32.xlu0 %v1744, 4
      %v1776 = vpop.permute.xlu0 %1775
      %1777 = vrot.lane.b32.xlu0 %v999, 8
      %v1778 = vpop.permute.xlu0 %1777
      %1779 = vrot.lane.b32.xlu0 %v1000, 8
      %v1780 = vpop.permute.xlu0 %1779
      %1781 = vrot.lane.b32.xlu0 %v1001, 8
      %v1782 = vpop.permute.xlu0 %1781
      %1783 = vrot.lane.b32.xlu0 %v1002, 8
      %v1784 = vpop.permute.xlu0 %1783
      %1785 = vrot.lane.b32.xlu0 %v1003, 8
      %v1786 = vpop.permute.xlu0 %1785
      %1787 = vrot.lane.b32.xlu0 %v1004, 8
      %v1788 = vpop.permute.xlu0 %1787
      %1789 = vrot.lane.b32.xlu0 %v1005, 8
      %v1790 = vpop.permute.xlu0 %1789
      %1791 = vrot.lane.b32.xlu0 %v1006, 8
      %v1792 = vpop.permute.xlu0 %1791
      %1793 = vrot.lane.b32.xlu0 %v1007, 8
      %v1794 = vpop.permute.xlu0 %1793
      %1795 = vrot.lane.b32.xlu0 %v1008, 8
      %v1796 = vpop.permute.xlu0 %1795
      %1797 = vrot.lane.b32.xlu0 %v1009, 8
      %v1798 = vpop.permute.xlu0 %1797
      %1799 = vrot.lane.b32.xlu0 %v1010, 8
      %v1800 = vpop.permute.xlu0 %1799
      %1801 = vrot.lane.b32.xlu0 %v1011, 8
      %v1802 = vpop.permute.xlu0 %1801
      %1803 = vrot.lane.b32.xlu0 %v1012, 8
      %v1804 = vpop.permute.xlu0 %1803
      %1805 = vrot.lane.b32.xlu0 %v1013, 8
      %v1806 = vpop.permute.xlu0 %1805
      %1807 = vrot.lane.b32.xlu0 %v1084, 8
      %v1808 = vpop.permute.xlu0 %1807
      %v1809 = vunpack.c.l.b16 %v864
      %v1810 = vunpack.c.l.b16 %v867
      %v1811 = vpack.c.b16 %v1810, %v1809
      %1812 = vrot.lane.b32.xlu0 %v1730, 12
      %v1813 = vpop.permute.xlu0 %1812
      %1814 = vrot.lane.b32.xlu0 %v1731, 12
      %v1815 = vpop.permute.xlu0 %1814
      %1816 = vrot.lane.b32.xlu0 %v1732, 12
      %v1817 = vpop.permute.xlu0 %1816
      %1818 = vrot.lane.b32.xlu0 %v1733, 12
      %v1819 = vpop.permute.xlu0 %1818
      %1820 = vrot.lane.b32.xlu0 %v1734, 12
      %v1821 = vpop.permute.xlu0 %1820
      %1822 = vrot.lane.b32.xlu0 %v1735, 12
      %v1823 = vpop.permute.xlu0 %1822
      %1824 = vrot.lane.b32.xlu0 %v1736, 12
      %v1825 = vpop.permute.xlu0 %1824
      %1826 = vrot.lane.b32.xlu0 %v1737, 12
      %v1827 = vpop.permute.xlu0 %1826
      %1828 = vrot.lane.b32.xlu0 %v1738, 12
      %v1829 = vpop.permute.xlu0 %1828
      %1830 = vrot.lane.b32.xlu0 %v1739, 12
      %v1831 = vpop.permute.xlu0 %1830
      %1832 = vrot.lane.b32.xlu0 %v1740, 12
      %v1833 = vpop.permute.xlu0 %1832
      %1834 = vrot.lane.b32.xlu0 %v1741, 12
      %v1835 = vpop.permute.xlu0 %1834
      %1836 = vrot.lane.b32.xlu0 %v1742, 12
      %v1837 = vpop.permute.xlu0 %1836
      %1838 = vrot.lane.b32.xlu0 %v1743, 12
      %v1839 = vpop.permute.xlu0 %1838
      %1840 = vrot.lane.b32.xlu0 %v1744, 12
      %v1841 = vpop.permute.xlu0 %1840
      %1842 = vrot.lane.b32.xlu0 %v1811, 12
      %v1843 = vpop.permute.xlu0 %1842
      %v1846 = vsel %vm1117, %v998, %v1746
      %v1849 = vsel %vm1117, %v999, %v1748
      %v1852 = vsel %vm1117, %v1000, %v1750
      %v1855 = vsel %vm1117, %v1001, %v1752
      %v1858 = vsel %vm1117, %v1002, %v1754
      %v1861 = vsel %vm1117, %v1003, %v1756
      %v1864 = vsel %vm1117, %v1004, %v1758
      %v1867 = vsel %vm1117, %v1005, %v1760
      %v1870 = vsel %vm1117, %v1006, %v1762
      %v1873 = vsel %vm1117, %v1007, %v1764
      %v1876 = vsel %vm1117, %v1008, %v1766
      %v1879 = vsel %vm1117, %v1009, %v1768
      %v1882 = vsel %vm1117, %v1010, %v1770
      %v1885 = vsel %vm1117, %v1011, %v1772
      %v1888 = vsel %vm1117, %v1012, %v1774
      %v1891 = vsel %vm1117, %v1013, %v1776
      %v1893 = vsel %vm1166, %v1846, %v1778
      %v1895 = vsel %vm1166, %v1849, %v1780
      %v1897 = vsel %vm1166, %v1852, %v1782
      %v1899 = vsel %vm1166, %v1855, %v1784
      %v1901 = vsel %vm1166, %v1858, %v1786
      %v1903 = vsel %vm1166, %v1861, %v1788
      %v1905 = vsel %vm1166, %v1864, %v1790
      %v1907 = vsel %vm1166, %v1867, %v1792
      %v1909 = vsel %vm1166, %v1870, %v1794
      %v1911 = vsel %vm1166, %v1873, %v1796
      %v1913 = vsel %vm1166, %v1876, %v1798
      %v1915 = vsel %vm1166, %v1879, %v1800
      %v1917 = vsel %vm1166, %v1882, %v1802
      %v1919 = vsel %vm1166, %v1885, %v1804
      %v1921 = vsel %vm1166, %v1888, %v1806
      %v1923 = vsel %vm1166, %v1891, %v1808
      %v1925 = vsel %vm1199, %v1893, %v1813
      %v1927 = vsel %vm1199, %v1895, %v1815
      %v1929 = vsel %vm1199, %v1897, %v1817
      %v1931 = vsel %vm1199, %v1899, %v1819
      %v1933 = vsel %vm1199, %v1901, %v1821
      %v1935 = vsel %vm1199, %v1903, %v1823
      %v1937 = vsel %vm1199, %v1905, %v1825
      %v1939 = vsel %vm1199, %v1907, %v1827
      %v1941 = vsel %vm1199, %v1909, %v1829
      %v1943 = vsel %vm1199, %v1911, %v1831
      %v1945 = vsel %vm1199, %v1913, %v1833
      %v1947 = vsel %vm1199, %v1915, %v1835
      %v1949 = vsel %vm1199, %v1917, %v1837
      %v1951 = vsel %vm1199, %v1919, %v1839
      %v1953 = vsel %vm1199, %v1921, %v1841
      %v1955 = vsel %vm1199, %v1923, %v1843
      %s1956 = scalar_lea.vmem %s2, 8
      %v1957 = vld [vmem:[%s1956] sm:$0xf]
      %v1958 = vld [vmem:[%s1956 + $0x4] sm:$0xf]
      %v1961 = vunpack.c.l.b16 %v1957
      %v1962 = vunpack.c.l.b16 %v1958
      %v1963 = vpack.c.b16 %v1962, %v1961
      %v1965 = vsel %vm1246, %v1925, 0
      %v1967 = vsel %vm1246, %v1927, 0
      %v1969 = vsel %vm1246, %v1929, 0
      %v1971 = vsel %vm1246, %v1931, 0
      %v1973 = vsel %vm1246, %v1933, 0
      %v1975 = vsel %vm1246, %v1935, 0
      %v1977 = vsel %vm1246, %v1937, 0
      %v1979 = vsel %vm1246, %v1939, 0
      %v1981 = vsel %vm1246, %v1941, 0
      %v1983 = vsel %vm1246, %v1943, 0
      %v1985 = vsel %vm1246, %v1945, 0
      %v1987 = vsel %vm1246, %v1947, 0
      %v1989 = vsel %vm1246, %v1949, 0
      %v1991 = vsel %vm1246, %v1951, 0
      %v1993 = vsel %vm1246, %v1953, 0
      %v1995 = vsel %vm1246, %v1955, 0
      %1997 = vmatprep.subr.bf16.mxu0 0
      %1998 = vmatpush1.bf16.msra.mxu0 %v1963
      %1999 = vmatprep.subr.bf16.mxu0 0
      %2000 = vmatpush1.bf16.msra.mxu0 0
      %2001 = vmatprep.subr.bf16.mxu0 0
      %2002 = vmatpush1.bf16.msra.mxu0 0
      %2003 = vmatprep.subr.bf16.mxu0 0
      %2004 = vmatpush1.bf16.msra.mxu0 0
      %2005 = vmatprep.subr.bf16.mxu0 0
      %2006 = vmatpush1.bf16.msra.mxu0 0
      %2007 = vmatprep.subr.bf16.mxu0 0
      %2008 = vmatpush1.bf16.msra.mxu0 0
      %2009 = vmatprep.subr.bf16.mxu0 0
      %2010 = vmatpush1.bf16.msra.mxu0 0
      %2011 = vmatprep.subr.bf16.mxu0 0
      %2012 = vmatpush1.bf16.msra.mxu0 0
      %2013 = vmatprep.subr.bf16.mxu0 0
      %2014 = vmatpush1.bf16.msra.mxu0 0
      %2015 = vmatprep.subr.bf16.mxu0 0
      %2016 = vmatpush1.bf16.msra.mxu0 0
      %2017 = vmatprep.subr.bf16.mxu0 0
      %2018 = vmatpush1.bf16.msra.mxu0 0
      %2019 = vmatprep.subr.bf16.mxu0 0
      %2020 = vmatpush1.bf16.msra.mxu0 0
      %2021 = vmatprep.subr.bf16.mxu0 0
      %2022 = vmatpush1.bf16.msra.mxu0 0
      %2023 = vmatprep.subr.bf16.mxu0 0
      %2024 = vmatpush1.bf16.msra.mxu0 0
      %2025 = vmatprep.subr.bf16.mxu0 0
      %2026 = vmatpush1.bf16.msra.mxu0 0
      %2027 = vmatprep.subr.bf16.mxu0 0
      %2028 = vmatpush1.bf16.msra.mxu0 0
      %2029 = vmatprep.mubr.bf16.mxu0 0
      %2030 = vmatmul.mubr.bf16.gmra.mrb[0].mxu0 %v1965
      %v2031 = vpop.f32.mrb[0].mxu0
      %v2032 = vadd.f32 %v1238, %v2031
      %v2033 = vpop.f32.mrb[0].mxu0
      %v2034 = vpop.f32.mrb[0].mxu0
      %v2035 = vadd.f32 %v1238, %v2034
      %v2036 = vpop.f32.mrb[0].mxu0
      %2037 = vmatprep.mubr.bf16.mxu0 0
      %2038 = vmatmul.mubr.bf16.gmra.mrb[0].mxu0 %v1967
      %v2039 = vpop.f32.mrb[0].mxu0
      %v2040 = vadd.f32 %v1238, %v2039
      %v2041 = vpop.f32.mrb[0].mxu0
      %v2042 = vpop.f32.mrb[0].mxu0
      %v2043 = vadd.f32 %v1238, %v2042
      %v2044 = vpop.f32.mrb[0].mxu0
      %2045 = vmatprep.mubr.bf16.mxu0 0
      %2046 = vmatmul.mubr.bf16.gmra.mrb[0].mxu0 %v1969
      %v2047 = vpop.f32.mrb[0].mxu0
      %v2048 = vadd.f32 %v1238, %v2047
      %v2049 = vpop.f32.mrb[0].mxu0
      %v2050 = vpop.f32.mrb[0].mxu0
      %v2051 = vadd.f32 %v1238, %v2050
      %v2052 = vpop.f32.mrb[0].mxu0
      %2053 = vmatprep.mubr.bf16.mxu0 0
      %2054 = vmatmul.mubr.bf16.gmra.mrb[0].mxu0 %v1971
      %v2055 = vpop.f32.mrb[0].mxu0
      %v2056 = vadd.f32 %v1238, %v2055
      %v2057 = vpop.f32.mrb[0].mxu0
      %v2058 = vpop.f32.mrb[0].mxu0
      %v2059 = vadd.f32 %v1238, %v2058
      %v2060 = vpop.f32.mrb[0].mxu0
      %2061 = vmatprep.mubr.bf16.mxu0 0
      %2062 = vmatmul.mubr.bf16.gmra.mrb[0].mxu0 %v1973
      %v2063 = vpop.f32.mrb[0].mxu0
      %v2064 = vadd.f32 %v1238, %v2063
      %v2065 = vpop.f32.mrb[0].mxu0
      %v2066 = vpop.f32.mrb[0].mxu0
      %v2067 = vadd.f32 %v1238, %v2066
      %v2068 = vpop.f32.mrb[0].mxu0
      %2069 = vmatprep.mubr.bf16.mxu0 0
      %2070 = vmatmul.mubr.bf16.gmra.mrb[0].mxu0 %v1975
      %v2071 = vpop.f32.mrb[0].mxu0
      %v2072 = vadd.f32 %v1238, %v2071
      %v2073 = vpop.f32.mrb[0].mxu0
      %v2074 = vpop.f32.mrb[0].mxu0
      %v2075 = vadd.f32 %v1238, %v2074
      %v2076 = vpop.f32.mrb[0].mxu0
      %2077 = vmatprep.mubr.bf16.mxu0 0
      %2078 = vmatmul.mubr.bf16.gmra.mrb[0].mxu0 %v1977
      %v2079 = vpop.f32.mrb[0].mxu0
      %v2080 = vadd.f32 %v1238, %v2079
      %v2081 = vpop.f32.mrb[0].mxu0
      %v2082 = vpop.f32.mrb[0].mxu0
      %v2083 = vadd.f32 %v1238, %v2082
      %v2084 = vpop.f32.mrb[0].mxu0
      %2085 = vmatprep.mubr.bf16.mxu0 0
      %2086 = vmatmul.mubr.bf16.gmra.mrb[0].mxu0 %v1979
      %v2087 = vpop.f32.mrb[0].mxu0
      %v2088 = vadd.f32 %v1238, %v2087
      %v2089 = vpop.f32.mrb[0].mxu0
      %v2090 = vpop.f32.mrb[0].mxu0
      %v2091 = vadd.f32 %v1238, %v2090
      %v2092 = vpop.f32.mrb[0].mxu0
      %2093 = vmatprep.mubr.bf16.mxu0 0
      %2094 = vmatmul.mubr.bf16.gmra.mrb[0].mxu0 %v1981
      %v2095 = vpop.f32.mrb[0].mxu0
      %v2096 = vadd.f32 %v1238, %v2095
      %v2097 = vpop.f32.mrb[0].mxu0
      %v2098 = vpop.f32.mrb[0].mxu0
      %v2099 = vadd.f32 %v1238, %v2098
      %v2100 = vpop.f32.mrb[0].mxu0
      %2101 = vmatprep.mubr.bf16.mxu0 0
      %2102 = vmatmul.mubr.bf16.gmra.mrb[0].mxu0 %v1983
      %v2103 = vpop.f32.mrb[0].mxu0
      %v2104 = vadd.f32 %v1238, %v2103
      %v2105 = vpop.f32.mrb[0].mxu0
      %v2106 = vpop.f32.mrb[0].mxu0
      %v2107 = vadd.f32 %v1238, %v2106
      %v2108 = vpop.f32.mrb[0].mxu0
      %2109 = vmatprep.mubr.bf16.mxu0 0
      %2110 = vmatmul.mubr.bf16.gmra.mrb[0].mxu0 %v1985
      %v2111 = vpop.f32.mrb[0].mxu0
      %v2112 = vadd.f32 %v1238, %v2111
      %v2113 = vpop.f32.mrb[0].mxu0
      %v2114 = vpop.f32.mrb[0].mxu0
      %v2115 = vadd.f32 %v1238, %v2114
      %v2116 = vpop.f32.mrb[0].mxu0
      %2117 = vmatprep.mubr.bf16.mxu0 0
      %2118 = vmatmul.mubr.bf16.gmra.mrb[0].mxu0 %v1987
      %v2119 = vpop.f32.mrb[0].mxu0
      %v2120 = vadd.f32 %v1238, %v2119
      %v2121 = vpop.f32.mrb[0].mxu0
      %v2122 = vpop.f32.mrb[0].mxu0
      %v2123 = vadd.f32 %v1238, %v2122
      %v2124 = vpop.f32.mrb[0].mxu0
      %2125 = vmatprep.mubr.bf16.mxu0 0
      %2126 = vmatmul.mubr.bf16.gmra.mrb[0].mxu0 %v1989
      %v2127 = vpop.f32.mrb[0].mxu0
      %v2128 = vadd.f32 %v1238, %v2127
      %v2129 = vpop.f32.mrb[0].mxu0
      %v2130 = vpop.f32.mrb[0].mxu0
      %v2131 = vadd.f32 %v1238, %v2130
      %v2132 = vpop.f32.mrb[0].mxu0
      %2133 = vmatprep.mubr.bf16.mxu0 0
      %2134 = vmatmul.mubr.bf16.gmra.mrb[0].mxu0 %v1991
      %v2135 = vpop.f32.mrb[0].mxu0
      %v2136 = vadd.f32 %v1238, %v2135
      %v2137 = vpop.f32.mrb[0].mxu0
      %v2138 = vpop.f32.mrb[0].mxu0
      %v2139 = vadd.f32 %v1238, %v2138
      %v2140 = vpop.f32.mrb[0].mxu0
      %2141 = vmatprep.mubr.bf16.mxu0 0
      %2142 = vmatmul.mubr.bf16.gmra.mrb[0].mxu0 %v1993
      %v2143 = vpop.f32.mrb[0].mxu0
      %v2144 = vadd.f32 %v1238, %v2143
      %v2145 = vpop.f32.mrb[0].mxu0
      %v2146 = vpop.f32.mrb[0].mxu0
      %v2147 = vadd.f32 %v1238, %v2146
      %v2148 = vpop.f32.mrb[0].mxu0
      %2149 = vmatprep.mubr.bf16.mxu0 0
      %2150 = vmatmul.mubr.bf16.gmra.mrb[0].mxu0 %v1995
      %v2151 = vpop.f32.mrb[0].mxu0
      %v2152 = vadd.f32 %v1238, %v2151
      %v2153 = vpop.f32.mrb[0].mxu0
      %v2154 = vpop.f32.mrb[0].mxu0
      %v2155 = vadd.f32 %v1238, %v2154
      %v2156 = vpop.f32.mrb[0].mxu0
      %2157 = vdwg.mxu0
      %vm2158 = vcmp.ge.f32.partialorder %v2032, 0.0
      %vm2159 = vcmp.ge.f32.partialorder %v2035, 0.0
      %vm2160 = vcmp.ge.f32.partialorder %v2040, 0.0
      %vm2161 = vcmp.ge.f32.partialorder %v2043, 0.0
      %vm2162 = vcmp.ge.f32.partialorder %v2048, 0.0
      %vm2163 = vcmp.ge.f32.partialorder %v2051, 0.0
      %vm2164 = vcmp.ge.f32.partialorder %v2056, 0.0
      %vm2165 = vcmp.ge.f32.partialorder %v2059, 0.0
      %vm2166 = vcmp.ge.f32.partialorder %v2064, 0.0
      %vm2167 = vcmp.ge.f32.partialorder %v2067, 0.0
      %vm2168 = vcmp.ge.f32.partialorder %v2072, 0.0
      %vm2169 = vcmp.ge.f32.partialorder %v2075, 0.0
      %vm2170 = vcmp.ge.f32.partialorder %v2080, 0.0
      %vm2171 = vcmp.ge.f32.partialorder %v2083, 0.0
      %vm2172 = vcmp.ge.f32.partialorder %v2088, 0.0
      %vm2173 = vcmp.ge.f32.partialorder %v2091, 0.0
      %vm2174 = vcmp.ge.f32.partialorder %v2096, 0.0
      %vm2175 = vcmp.ge.f32.partialorder %v2099, 0.0
      %vm2176 = vcmp.ge.f32.partialorder %v2104, 0.0
      %vm2177 = vcmp.ge.f32.partialorder %v2107, 0.0
      %vm2178 = vcmp.ge.f32.partialorder %v2112, 0.0
      %vm2179 = vcmp.ge.f32.partialorder %v2115, 0.0
      %vm2180 = vcmp.ge.f32.partialorder %v2120, 0.0
      %vm2181 = vcmp.ge.f32.partialorder %v2123, 0.0
      %vm2182 = vcmp.ge.f32.partialorder %v2128, 0.0
      %vm2183 = vcmp.ge.f32.partialorder %v2131, 0.0
      %vm2184 = vcmp.ge.f32.partialorder %v2136, 0.0
      %vm2185 = vcmp.ge.f32.partialorder %v2139, 0.0
      %vm2186 = vcmp.ge.f32.partialorder %v2144, 0.0
      %vm2187 = vcmp.ge.f32.partialorder %v2147, 0.0
      %vm2188 = vcmp.ge.f32.partialorder %v2152, 0.0
      %vm2189 = vcmp.ge.f32.partialorder %v2155, 0.0
      %v2190 = vmul.f32 %v1472, %v2032
      %v2191 = vmul.f32 %v1472, %v2035
      %v2192 = vmul.f32 %v1472, %v2040
      %v2193 = vmul.f32 %v1472, %v2043
      %v2194 = vmul.f32 %v1472, %v2048
      %v2195 = vmul.f32 %v1472, %v2051
      %v2196 = vmul.f32 %v1472, %v2056
      %v2197 = vmul.f32 %v1472, %v2059
      %v2198 = vmul.f32 %v1472, %v2064
      %v2199 = vmul.f32 %v1472, %v2067
      %v2200 = vmul.f32 %v1472, %v2072
      %v2201 = vmul.f32 %v1472, %v2075
      %v2202 = vmul.f32 %v1472, %v2080
      %v2203 = vmul.f32 %v1472, %v2083
      %v2204 = vmul.f32 %v1472, %v2088
      %v2205 = vmul.f32 %v1472, %v2091
      %v2206 = vmul.f32 %v1472, %v2096
      %v2207 = vmul.f32 %v1472, %v2099
      %v2208 = vmul.f32 %v1472, %v2104
      %v2209 = vmul.f32 %v1472, %v2107
      %v2210 = vmul.f32 %v1472, %v2112
      %v2211 = vmul.f32 %v1472, %v2115
      %v2212 = vmul.f32 %v1472, %v2120
      %v2213 = vmul.f32 %v1472, %v2123
      %v2214 = vmul.f32 %v1472, %v2128
      %v2215 = vmul.f32 %v1472, %v2131
      %v2216 = vmul.f32 %v1472, %v2136
      %v2217 = vmul.f32 %v1472, %v2139
      %v2218 = vmul.f32 %v1472, %v2144
      %v2219 = vmul.f32 %v1472, %v2147
      %v2220 = vmul.f32 %v1472, %v2152
      %v2221 = vmul.f32 %v1472, %v2155
      %v2222 = vsel %vm2158, %v2032, %v2190
      %v2223 = vsel %vm2159, %v2035, %v2191
      %v2224 = vsel %vm2160, %v2040, %v2192
      %v2225 = vsel %vm2161, %v2043, %v2193
      %v2226 = vsel %vm2162, %v2048, %v2194
      %v2227 = vsel %vm2163, %v2051, %v2195
      %v2228 = vsel %vm2164, %v2056, %v2196
      %v2229 = vsel %vm2165, %v2059, %v2197
      %v2230 = vsel %vm2166, %v2064, %v2198
      %v2231 = vsel %vm2167, %v2067, %v2199
      %v2232 = vsel %vm2168, %v2072, %v2200
      %v2233 = vsel %vm2169, %v2075, %v2201
      %v2234 = vsel %vm2170, %v2080, %v2202
      %v2235 = vsel %vm2171, %v2083, %v2203
      %v2236 = vsel %vm2172, %v2088, %v2204
      %v2237 = vsel %vm2173, %v2091, %v2205
      %v2238 = vsel %vm2174, %v2096, %v2206
      %v2239 = vsel %vm2175, %v2099, %v2207
      %v2240 = vsel %vm2176, %v2104, %v2208
      %v2241 = vsel %vm2177, %v2107, %v2209
      %v2242 = vsel %vm2178, %v2112, %v2210
      %v2243 = vsel %vm2179, %v2115, %v2211
      %v2244 = vsel %vm2180, %v2120, %v2212
      %v2245 = vsel %vm2181, %v2123, %v2213
      %v2246 = vsel %vm2182, %v2128, %v2214
      %v2247 = vsel %vm2183, %v2131, %v2215
      %v2248 = vsel %vm2184, %v2136, %v2216
      %v2249 = vsel %vm2185, %v2139, %v2217
      %v2250 = vsel %vm2186, %v2144, %v2218
      %v2251 = vsel %vm2187, %v2147, %v2219
      %v2252 = vsel %vm2188, %v2152, %v2220
      %v2253 = vsel %vm2189, %v2155, %v2221
      %v2254 = vpack.c.bf16 %v2223, %v2222
      %v2255 = vpack.c.bf16 %v2225, %v2224
      %v2256 = vpack.c.bf16 %v2227, %v2226
      %v2257 = vpack.c.bf16 %v2229, %v2228
      %v2258 = vpack.c.bf16 %v2231, %v2230
      %v2259 = vpack.c.bf16 %v2233, %v2232
      %v2260 = vpack.c.bf16 %v2235, %v2234
      %v2261 = vpack.c.bf16 %v2237, %v2236
      %v2262 = vpack.c.bf16 %v2239, %v2238
      %v2263 = vpack.c.bf16 %v2241, %v2240
      %v2264 = vpack.c.bf16 %v2243, %v2242
      %v2265 = vpack.c.bf16 %v2245, %v2244
      %v2266 = vpack.c.bf16 %v2247, %v2246
      %v2267 = vpack.c.bf16 %v2249, %v2248
      %v2268 = vpack.c.bf16 %v2251, %v2250
      %v2269 = vpack.c.bf16 %v2253, %v2252
      %v2286 = vunpack.c.l.b16 %v2254
      %v2287 = vunpack.c.h.b16 %v2254
      %v2288 = vunpack.c.l.b16 %v2255
      %v2289 = vunpack.c.h.b16 %v2255
      %v2290 = vunpack.c.l.b16 %v2256
      %v2291 = vunpack.c.h.b16 %v2256
      %v2292 = vunpack.c.l.b16 %v2257
      %v2293 = vunpack.c.h.b16 %v2257
      %v2294 = vunpack.c.l.b16 %v2258
      %v2295 = vunpack.c.h.b16 %v2258
      %v2296 = vunpack.c.l.b16 %v2259
      %v2297 = vunpack.c.h.b16 %v2259
      %v2298 = vunpack.c.l.b16 %v2260
      %v2299 = vunpack.c.h.b16 %v2260
      %v2300 = vunpack.c.l.b16 %v2261
      %v2301 = vunpack.c.h.b16 %v2261
      %v2302 = vunpack.c.l.b16 %v2262
      %v2303 = vunpack.c.h.b16 %v2262
      %v2304 = vunpack.c.l.b16 %v2263
      %v2305 = vunpack.c.h.b16 %v2263
      %v2306 = vunpack.c.l.b16 %v2264
      %v2307 = vunpack.c.h.b16 %v2264
      %v2308 = vunpack.c.l.b16 %v2265
      %v2309 = vunpack.c.h.b16 %v2265
      %v2310 = vunpack.c.l.b16 %v2266
      %v2311 = vunpack.c.h.b16 %v2266
      %v2312 = vunpack.c.l.b16 %v2267
      %v2313 = vunpack.c.h.b16 %v2267
      %v2314 = vunpack.c.l.b16 %v2268
      %v2315 = vunpack.c.h.b16 %v2268
      %v2316 = vunpack.c.l.b16 %v2269
      %v2317 = vunpack.c.h.b16 %v2269
      %v2318 = vpack.c.b16 %v2286, %v2286
      %v2319 = vpack.c.b16 %v2287, %v2287
      %v2320 = vpack.c.b16 %v2288, %v2288
      %v2321 = vpack.c.b16 %v2289, %v2289
      %v2322 = vpack.c.b16 %v2290, %v2290
      %v2323 = vpack.c.b16 %v2291, %v2291
      %v2324 = vpack.c.b16 %v2292, %v2292
      %v2325 = vpack.c.b16 %v2293, %v2293
      %v2326 = vpack.c.b16 %v2294, %v2294
      %v2327 = vpack.c.b16 %v2295, %v2295
      %v2328 = vpack.c.b16 %v2296, %v2296
      %v2329 = vpack.c.b16 %v2297, %v2297
      %v2330 = vpack.c.b16 %v2298, %v2298
      %v2331 = vpack.c.b16 %v2299, %v2299
      %v2332 = vpack.c.b16 %v2300, %v2300
      %v2333 = vpack.c.b16 %v2301, %v2301
      %v2334 = vpack.c.b16 %v2302, %v2302
      %v2335 = vpack.c.b16 %v2303, %v2303
      %v2336 = vpack.c.b16 %v2304, %v2304
      %v2337 = vpack.c.b16 %v2305, %v2305
      %v2338 = vpack.c.b16 %v2306, %v2306
      %v2339 = vpack.c.b16 %v2307, %v2307
      %v2340 = vpack.c.b16 %v2308, %v2308
      %v2341 = vpack.c.b16 %v2309, %v2309
      %v2342 = vpack.c.b16 %v2310, %v2310
      %v2343 = vpack.c.b16 %v2311, %v2311
      %v2344 = vpack.c.b16 %v2312, %v2312
      %v2345 = vpack.c.b16 %v2313, %v2313
      %v2346 = vpack.c.b16 %v2314, %v2314
      %v2347 = vpack.c.b16 %v2315, %v2315
      %v2348 = vpack.c.b16 %v2316, %v2316
      %v2349 = vpack.c.b16 %v2317, %v2317
      %s2382 = scalar_lea.vmem %s208, 128
      %2383 = vst [vmem:[%s2382] sm:$0xf] %v2318
      %2384 = vst [vmem:[%s2382 + $0x4] sm:$0xf] %v2319
      %2385 = vst [vmem:[%s2382 + $0x8] sm:$0xf] %v2320
      %2386 = vst [vmem:[%s2382 + $0xc] sm:$0xf] %v2321
      %2387 = vst [vmem:[%s2382 + $0x10] sm:$0xf] %v2322
      %2388 = vst [vmem:[%s2382 + $0x14] sm:$0xf] %v2323
      %2389 = vst [vmem:[%s2382 + $0x18] sm:$0xf] %v2324
      %2390 = vst [vmem:[%s2382 + $0x1c] sm:$0xf] %v2325
      %2391 = vst [vmem:[%s2382 + $0x20] sm:$0xf] %v2326
      %2392 = vst [vmem:[%s2382 + $0x24] sm:$0xf] %v2327
      %2393 = vst [vmem:[%s2382 + $0x28] sm:$0xf] %v2328
      %2394 = vst [vmem:[%s2382 + $0x2c] sm:$0xf] %v2329
      %2395 = vst [vmem:[%s2382 + $0x30] sm:$0xf] %v2330
      %2396 = vst [vmem:[%s2382 + $0x34] sm:$0xf] %v2331
      %2397 = vst [vmem:[%s2382 + $0x38] sm:$0xf] %v2332
      %2398 = vst [vmem:[%s2382 + $0x3c] sm:$0xf] %v2333
      %2399 = vst [vmem:[%s2382 + $0x40] sm:$0xf] %v2334
      %2400 = vst [vmem:[%s2382 + $0x44] sm:$0xf] %v2335
      %2401 = vst [vmem:[%s2382 + $0x48] sm:$0xf] %v2336
      %2402 = vst [vmem:[%s2382 + $0x4c] sm:$0xf] %v2337
      %2403 = vst [vmem:[%s2382 + $0x50] sm:$0xf] %v2338
      %2404 = vst [vmem:[%s2382 + $0x54] sm:$0xf] %v2339
      %2405 = vst [vmem:[%s2382 + $0x58] sm:$0xf] %v2340
      %2406 = vst [vmem:[%s2382 + $0x5c] sm:$0xf] %v2341
      %2407 = vst [vmem:[%s2382 + $0x60] sm:$0xf] %v2342
      %2408 = vst [vmem:[%s2382 + $0x64] sm:$0xf] %v2343
      %2409 = vst [vmem:[%s2382 + $0x68] sm:$0xf] %v2344
      %2410 = vst [vmem:[%s2382 + $0x6c] sm:$0xf] %v2345
      %2411 = vst [vmem:[%s2382 + $0x70] sm:$0xf] %v2346
      %2412 = vst [vmem:[%s2382 + $0x74] sm:$0xf] %v2347
      %2413 = vst [vmem:[%s2382 + $0x78] sm:$0xf] %v2348
      %2414 = vst [vmem:[%s2382 + $0x7c] sm:$0xf] %v2349
      %2415 = vrot.lane.b32.xlu0 %v1084, 4
      %v2416 = vpop.permute.xlu0 %2415
      %v2418 = vunpack.c.l.b16 %v246
      %v2419 = vunpack.c.l.b16 %v247
      %v2420 = vpack.c.b16 %v2419, %v2418
      %2421 = vrot.lane.b32.xlu0 %v2420, 8
      %v2422 = vpop.permute.xlu0 %2421
      %v2423 = vunpack.c.l.b16 %v881
      %v2424 = vunpack.c.l.b16 %v891
      %v2425 = vpack.c.b16 %v2424, %v2423
      %2426 = vrot.lane.b32.xlu0 %v2425, 12
      %v2427 = vpop.permute.xlu0 %2426
      %v2430 = vsel %vm1117, %v1049, %v2416
      %v2432 = vsel %vm1166, %v2430, %v2422
      %v2434 = vsel %vm1199, %v2432, %v2427
      %s2435 = scalar_lea.vmem %s2, 16
      %v2436 = vld [vmem:[%s2435] sm:$0xf]
      %v2437 = vld [vmem:[%s2435 + $0x4] sm:$0xf]
      %v2440 = vunpack.c.l.b16 %v2436
      %v2441 = vunpack.c.l.b16 %v2437
      %v2442 = vpack.c.b16 %v2441, %v2440
      %v2444 = vsel %vm1246, %v2434, 0
      %2446 = vmatprep.subr.bf16.mxu0 0
      %2447 = vmatpush1.bf16.msra.mxu0 %v2442
      %2448 = vmatprep.subr.bf16.mxu0 0
      %2449 = vmatpush1.bf16.msra.mxu0 0
      %2450 = vmatprep.subr.bf16.mxu0 0
      %2451 = vmatpush1.bf16.msra.mxu0 0
      %2452 = vmatprep.subr.bf16.mxu0 0
      %2453 = vmatpush1.bf16.msra.mxu0 0
      %2454 = vmatprep.subr.bf16.mxu0 0
      %2455 = vmatpush1.bf16.msra.mxu0 0
      %2456 = vmatprep.subr.bf16.mxu0 0
      %2457 = vmatpush1.bf16.msra.mxu0 0
      %2458 = vmatprep.subr.bf16.mxu0 0
      %2459 = vmatpush1.bf16.msra.mxu0 0
      %2460 = vmatprep.subr.bf16.mxu0 0
      %2461 = vmatpush1.bf16.msra.mxu0 0
      %2462 = vmatprep.subr.bf16.mxu0 0
      %2463 = vmatpush1.bf16.msra.mxu0 0
      %2464 = vmatprep.subr.bf16.mxu0 0
      %2465 = vmatpush1.bf16.msra.mxu0 0
      %2466 = vmatprep.subr.bf16.mxu0 0
      %2467 = vmatpush1.bf16.msra.mxu0 0
      %2468 = vmatprep.subr.bf16.mxu0 0
      %2469 = vmatpush1.bf16.msra.mxu0 0
      %2470 = vmatprep.subr.bf16.mxu0 0
      %2471 = vmatpush1.bf16.msra.mxu0 0
      %2472 = vmatprep.subr.bf16.mxu0 0
      %2473 = vmatpush1.bf16.msra.mxu0 0
      %2474 = vmatprep.subr.bf16.mxu0 0
      %2475 = vmatpush1.bf16.msra.mxu0 0
      %2476 = vmatprep.subr.bf16.mxu0 0
      %2477 = vmatpush1.bf16.msra.mxu0 0
      %2478 = vmatprep.mubr.bf16.mxu0 0
      %2479 = vmatmul.mubr.bf16.gmra.mrb[0].mxu0 %v1249
      %v2480 = vpop.f32.mrb[0].mxu0
      %v2481 = vadd.f32 %v1238, %v2480
      %v2482 = vpop.f32.mrb[0].mxu0
      %v2483 = vpop.f32.mrb[0].mxu0
      %v2484 = vadd.f32 %v1238, %v2483
      %v2485 = vpop.f32.mrb[0].mxu0
      %2486 = vmatprep.mubr.bf16.mxu0 0
      %2487 = vmatmul.mubr.bf16.gmra.mrb[0].mxu0 %v1251
      %v2488 = vpop.f32.mrb[0].mxu0
      %v2489 = vadd.f32 %v1238, %v2488
      %v2490 = vpop.f32.mrb[0].mxu0
      %v2491 = vpop.f32.mrb[0].mxu0
      %v2492 = vadd.f32 %v1238, %v2491
      %v2493 = vpop.f32.mrb[0].mxu0
      %2494 = vmatprep.mubr.bf16.mxu0 0
      %2495 = vmatmul.mubr.bf16.gmra.mrb[0].mxu0 %v1253
      %v2496 = vpop.f32.mrb[0].mxu0
      %v2497 = vadd.f32 %v1238, %v2496
      %v2498 = vpop.f32.mrb[0].mxu0
      %v2499 = vpop.f32.mrb[0].mxu0
      %v2500 = vadd.f32 %v1238, %v2499
      %v2501 = vpop.f32.mrb[0].mxu0
      %2502 = vmatprep.mubr.bf16.mxu0 0
      %2503 = vmatmul.mubr.bf16.gmra.mrb[0].mxu0 %v1255
      %v2504 = vpop.f32.mrb[0].mxu0
      %v2505 = vadd.f32 %v1238, %v2504
      %v2506 = vpop.f32.mrb[0].mxu0
      %v2507 = vpop.f32.mrb[0].mxu0
      %v2508 = vadd.f32 %v1238, %v2507
      %v2509 = vpop.f32.mrb[0].mxu0
      %2510 = vmatprep.mubr.bf16.mxu0 0
      %2511 = vmatmul.mubr.bf16.gmra.mrb[0].mxu0 %v1257
      %v2512 = vpop.f32.mrb[0].mxu0
      %v2513 = vadd.f32 %v1238, %v2512
      %v2514 = vpop.f32.mrb[0].mxu0
      %v2515 = vpop.f32.mrb[0].mxu0
      %v2516 = vadd.f32 %v1238, %v2515
      %v2517 = vpop.f32.mrb[0].mxu0
      %2518 = vmatprep.mubr.bf16.mxu0 0
      %2519 = vmatmul.mubr.bf16.gmra.mrb[0].mxu0 %v1259
      %v2520 = vpop.f32.mrb[0].mxu0
      %v2521 = vadd.f32 %v1238, %v2520
      %v2522 = vpop.f32.mrb[0].mxu0
      %v2523 = vpop.f32.mrb[0].mxu0
      %v2524 = vadd.f32 %v1238, %v2523
      %v2525 = vpop.f32.mrb[0].mxu0
      %2526 = vmatprep.mubr.bf16.mxu0 0
      %2527 = vmatmul.mubr.bf16.gmra.mrb[0].mxu0 %v1261
      %v2528 = vpop.f32.mrb[0].mxu0
      %v2529 = vadd.f32 %v1238, %v2528
      %v2530 = vpop.f32.mrb[0].mxu0
      %v2531 = vpop.f32.mrb[0].mxu0
      %v2532 = vadd.f32 %v1238, %v2531
      %v2533 = vpop.f32.mrb[0].mxu0
      %2534 = vmatprep.mubr.bf16.mxu0 0
      %2535 = vmatmul.mubr.bf16.gmra.mrb[0].mxu0 %v1263
      %v2536 = vpop.f32.mrb[0].mxu0
      %v2537 = vadd.f32 %v1238, %v2536
      %v2538 = vpop.f32.mrb[0].mxu0
      %v2539 = vpop.f32.mrb[0].mxu0
      %v2540 = vadd.f32 %v1238, %v2539
      %v2541 = vpop.f32.mrb[0].mxu0
      %2542 = vmatprep.mubr.bf16.mxu0 0
      %2543 = vmatmul.mubr.bf16.gmra.mrb[0].mxu0 %v1265
      %v2544 = vpop.f32.mrb[0].mxu0
      %v2545 = vadd.f32 %v1238, %v2544
      %v2546 = vpop.f32.mrb[0].mxu0
      %v2547 = vpop.f32.mrb[0].mxu0
      %v2548 = vadd.f32 %v1238, %v2547
      %v2549 = vpop.f32.mrb[0].mxu0
      %2550 = vmatprep.mubr.bf16.mxu0 0
      %2551 = vmatmul.mubr.bf16.gmra.mrb[0].mxu0 %v1267
      %v2552 = vpop.f32.mrb[0].mxu0
      %v2553 = vadd.f32 %v1238, %v2552
      %v2554 = vpop.f32.mrb[0].mxu0
      %v2555 = vpop.f32.mrb[0].mxu0
      %v2556 = vadd.f32 %v1238, %v2555
      %v2557 = vpop.f32.mrb[0].mxu0
      %2558 = vmatprep.mubr.bf16.mxu0 0
      %2559 = vmatmul.mubr.bf16.gmra.mrb[0].mxu0 %v1269
      %v2560 = vpop.f32.mrb[0].mxu0
      %v2561 = vadd.f32 %v1238, %v2560
      %v2562 = vpop.f32.mrb[0].mxu0
      %v2563 = vpop.f32.mrb[0].mxu0
      %v2564 = vadd.f32 %v1238, %v2563
      %v2565 = vpop.f32.mrb[0].mxu0
      %2566 = vmatprep.mubr.bf16.mxu0 0
      %2567 = vmatmul.mubr.bf16.gmra.mrb[0].mxu0 %v1271
      %v2568 = vpop.f32.mrb[0].mxu0
      %v2569 = vadd.f32 %v1238, %v2568
      %v2570 = vpop.f32.mrb[0].mxu0
      %v2571 = vpop.f32.mrb[0].mxu0
      %v2572 = vadd.f32 %v1238, %v2571
      %v2573 = vpop.f32.mrb[0].mxu0
      %2574 = vmatprep.mubr.bf16.mxu0 0
      %2575 = vmatmul.mubr.bf16.gmra.mrb[0].mxu0 %v1273
      %v2576 = vpop.f32.mrb[0].mxu0
      %v2577 = vadd.f32 %v1238, %v2576
      %v2578 = vpop.f32.mrb[0].mxu0
      %v2579 = vpop.f32.mrb[0].mxu0
      %v2580 = vadd.f32 %v1238, %v2579
      %v2581 = vpop.f32.mrb[0].mxu0
      %2582 = vmatprep.mubr.bf16.mxu0 0
      %2583 = vmatmul.mubr.bf16.gmra.mrb[0].mxu0 %v1275
      %v2584 = vpop.f32.mrb[0].mxu0
      %v2585 = vadd.f32 %v1238, %v2584
      %v2586 = vpop.f32.mrb[0].mxu0
      %v2587 = vpop.f32.mrb[0].mxu0
      %v2588 = vadd.f32 %v1238, %v2587
      %v2589 = vpop.f32.mrb[0].mxu0
      %2590 = vmatprep.mubr.bf16.mxu0 0
      %2591 = vmatmul.mubr.bf16.gmra.mrb[0].mxu0 %v1277
      %v2592 = vpop.f32.mrb[0].mxu0
      %v2593 = vadd.f32 %v1238, %v2592
      %v2594 = vpop.f32.mrb[0].mxu0
      %v2595 = vpop.f32.mrb[0].mxu0
      %v2596 = vadd.f32 %v1238, %v2595
      %v2597 = vpop.f32.mrb[0].mxu0
      %2598 = vmatprep.mubr.bf16.mxu0 0
      %2599 = vmatmul.mubr.bf16.gmra.mrb[0].mxu0 %v2444
      %v2600 = vpop.f32.mrb[0].mxu0
      %v2601 = vadd.f32 %v1238, %v2600
      %v2602 = vpop.f32.mrb[0].mxu0
      %v2603 = vpop.f32.mrb[0].mxu0
      %v2604 = vadd.f32 %v1238, %v2603
      %v2605 = vpop.f32.mrb[0].mxu0
      %2606 = vdwg.mxu0
      %vm2607 = vcmp.ge.f32.partialorder %v2481, 0.0
      %vm2608 = vcmp.ge.f32.partialorder %v2484, 0.0
      %vm2609 = vcmp.ge.f32.partialorder %v2489, 0.0
      %vm2610 = vcmp.ge.f32.partialorder %v2492, 0.0
      %vm2611 = vcmp.ge.f32.partialorder %v2497, 0.0
      %vm2612 = vcmp.ge.f32.partialorder %v2500, 0.0
      %vm2613 = vcmp.ge.f32.partialorder %v2505, 0.0
      %vm2614 = vcmp.ge.f32.partialorder %v2508, 0.0
      %vm2615 = vcmp.ge.f32.partialorder %v2513, 0.0
      %vm2616 = vcmp.ge.f32.partialorder %v2516, 0.0
      %vm2617 = vcmp.ge.f32.partialorder %v2521, 0.0
      %vm2618 = vcmp.ge.f32.partialorder %v2524, 0.0
      %vm2619 = vcmp.ge.f32.partialorder %v2529, 0.0
      %vm2620 = vcmp.ge.f32.partialorder %v2532, 0.0
      %vm2621 = vcmp.ge.f32.partialorder %v2537, 0.0
      %vm2622 = vcmp.ge.f32.partialorder %v2540, 0.0
      %vm2623 = vcmp.ge.f32.partialorder %v2545, 0.0
      %vm2624 = vcmp.ge.f32.partialorder %v2548, 0.0
      %vm2625 = vcmp.ge.f32.partialorder %v2553, 0.0
      %vm2626 = vcmp.ge.f32.partialorder %v2556, 0.0
      %vm2627 = vcmp.ge.f32.partialorder %v2561, 0.0
      %vm2628 = vcmp.ge.f32.partialorder %v2564, 0.0
      %vm2629 = vcmp.ge.f32.partialorder %v2569, 0.0
      %vm2630 = vcmp.ge.f32.partialorder %v2572, 0.0
      %vm2631 = vcmp.ge.f32.partialorder %v2577, 0.0
      %vm2632 = vcmp.ge.f32.partialorder %v2580, 0.0
      %vm2633 = vcmp.ge.f32.partialorder %v2585, 0.0
      %vm2634 = vcmp.ge.f32.partialorder %v2588, 0.0
      %vm2635 = vcmp.ge.f32.partialorder %v2593, 0.0
      %vm2636 = vcmp.ge.f32.partialorder %v2596, 0.0
      %vm2637 = vcmp.ge.f32.partialorder %v2601, 0.0
      %vm2638 = vcmp.ge.f32.partialorder %v2604, 0.0
      %v2639 = vmul.f32 %v1472, %v2481
      %v2640 = vmul.f32 %v1472, %v2484
      %v2641 = vmul.f32 %v1472, %v2489
      %v2642 = vmul.f32 %v1472, %v2492
      %v2643 = vmul.f32 %v1472, %v2497
      %v2644 = vmul.f32 %v1472, %v2500
      %v2645 = vmul.f32 %v1472, %v2505
      %v2646 = vmul.f32 %v1472, %v2508
      %v2647 = vmul.f32 %v1472, %v2513
      %v2648 = vmul.f32 %v1472, %v2516
      %v2649 = vmul.f32 %v1472, %v2521
      %v2650 = vmul.f32 %v1472, %v2524
      %v2651 = vmul.f32 %v1472, %v2529
      %v2652 = vmul.f32 %v1472, %v2532
      %v2653 = vmul.f32 %v1472, %v2537
      %v2654 = vmul.f32 %v1472, %v2540
      %v2655 = vmul.f32 %v1472, %v2545
      %v2656 = vmul.f32 %v1472, %v2548
      %v2657 = vmul.f32 %v1472, %v2553
      %v2658 = vmul.f32 %v1472, %v2556
      %v2659 = vmul.f32 %v1472, %v2561
      %v2660 = vmul.f32 %v1472, %v2564
      %v2661 = vmul.f32 %v1472, %v2569
      %v2662 = vmul.f32 %v1472, %v2572
      %v2663 = vmul.f32 %v1472, %v2577
      %v2664 = vmul.f32 %v1472, %v2580
      %v2665 = vmul.f32 %v1472, %v2585
      %v2666 = vmul.f32 %v1472, %v2588
      %v2667 = vmul.f32 %v1472, %v2593
      %v2668 = vmul.f32 %v1472, %v2596
      %v2669 = vmul.f32 %v1472, %v2601
      %v2670 = vmul.f32 %v1472, %v2604
      %v2671 = vsel %vm2607, %v2481, %v2639
      %v2672 = vsel %vm2608, %v2484, %v2640
      %v2673 = vsel %vm2609, %v2489, %v2641
      %v2674 = vsel %vm2610, %v2492, %v2642
      %v2675 = vsel %vm2611, %v2497, %v2643
      %v2676 = vsel %vm2612, %v2500, %v2644
      %v2677 = vsel %vm2613, %v2505, %v2645
      %v2678 = vsel %vm2614, %v2508, %v2646
      %v2679 = vsel %vm2615, %v2513, %v2647
      %v2680 = vsel %vm2616, %v2516, %v2648
      %v2681 = vsel %vm2617, %v2521, %v2649
      %v2682 = vsel %vm2618, %v2524, %v2650
      %v2683 = vsel %vm2619, %v2529, %v2651
      %v2684 = vsel %vm2620, %v2532, %v2652
      %v2685 = vsel %vm2621, %v2537, %v2653
      %v2686 = vsel %vm2622, %v2540, %v2654
      %v2687 = vsel %vm2623, %v2545, %v2655
      %v2688 = vsel %vm2624, %v2548, %v2656
      %v2689 = vsel %vm2625, %v2553, %v2657
      %v2690 = vsel %vm2626, %v2556, %v2658
      %v2691 = vsel %vm2627, %v2561, %v2659
      %v2692 = vsel %vm2628, %v2564, %v2660
      %v2693 = vsel %vm2629, %v2569, %v2661
      %v2694 = vsel %vm2630, %v2572, %v2662
      %v2695 = vsel %vm2631, %v2577, %v2663
      %v2696 = vsel %vm2632, %v2580, %v2664
      %v2697 = vsel %vm2633, %v2585, %v2665
      %v2698 = vsel %vm2634, %v2588, %v2666
      %v2699 = vsel %vm2635, %v2593, %v2667
      %v2700 = vsel %vm2636, %v2596, %v2668
      %v2701 = vsel %vm2637, %v2601, %v2669
      %v2702 = vsel %vm2638, %v2604, %v2670
      %v2703 = vpack.c.bf16 %v2672, %v2671
      %v2704 = vpack.c.bf16 %v2674, %v2673
      %v2705 = vpack.c.bf16 %v2676, %v2675
      %v2706 = vpack.c.bf16 %v2678, %v2677
      %v2707 = vpack.c.bf16 %v2680, %v2679
      %v2708 = vpack.c.bf16 %v2682, %v2681
      %v2709 = vpack.c.bf16 %v2684, %v2683
      %v2710 = vpack.c.bf16 %v2686, %v2685
      %v2711 = vpack.c.bf16 %v2688, %v2687
      %v2712 = vpack.c.bf16 %v2690, %v2689
      %v2713 = vpack.c.bf16 %v2692, %v2691
      %v2714 = vpack.c.bf16 %v2694, %v2693
      %v2715 = vpack.c.bf16 %v2696, %v2695
      %v2716 = vpack.c.bf16 %v2698, %v2697
      %v2717 = vpack.c.bf16 %v2700, %v2699
      %v2718 = vpack.c.bf16 %v2702, %v2701
      %v2735 = vunpack.c.l.b16 %v2703
      %v2736 = vunpack.c.h.b16 %v2703
      %v2737 = vunpack.c.l.b16 %v2704
      %v2738 = vunpack.c.h.b16 %v2704
      %v2739 = vunpack.c.l.b16 %v2705
      %v2740 = vunpack.c.h.b16 %v2705
      %v2741 = vunpack.c.l.b16 %v2706
      %v2742 = vunpack.c.h.b16 %v2706
      %v2743 = vunpack.c.l.b16 %v2707
      %v2744 = vunpack.c.h.b16 %v2707
      %v2745 = vunpack.c.l.b16 %v2708
      %v2746 = vunpack.c.h.b16 %v2708
      %v2747 = vunpack.c.l.b16 %v2709
      %v2748 = vunpack.c.h.b16 %v2709
      %v2749 = vunpack.c.l.b16 %v2710
      %v2750 = vunpack.c.h.b16 %v2710
      %v2751 = vunpack.c.l.b16 %v2711
      %v2752 = vunpack.c.h.b16 %v2711
      %v2753 = vunpack.c.l.b16 %v2712
      %v2754 = vunpack.c.h.b16 %v2712
      %v2755 = vunpack.c.l.b16 %v2713
      %v2756 = vunpack.c.h.b16 %v2713
      %v2757 = vunpack.c.l.b16 %v2714
      %v2758 = vunpack.c.h.b16 %v2714
      %v2759 = vunpack.c.l.b16 %v2715
      %v2760 = vunpack.c.h.b16 %v2715
      %v2761 = vunpack.c.l.b16 %v2716
      %v2762 = vunpack.c.h.b16 %v2716
      %v2763 = vunpack.c.l.b16 %v2717
      %v2764 = vunpack.c.h.b16 %v2717
      %v2765 = vunpack.c.l.b16 %v2718
      %v2766 = vunpack.c.h.b16 %v2718
      %v2767 = vpack.c.b16 %v2735, %v2735
      %v2768 = vpack.c.b16 %v2736, %v2736
      %v2769 = vpack.c.b16 %v2737, %v2737
      %v2770 = vpack.c.b16 %v2738, %v2738
      %v2771 = vpack.c.b16 %v2739, %v2739
      %v2772 = vpack.c.b16 %v2740, %v2740
      %v2773 = vpack.c.b16 %v2741, %v2741
      %v2774 = vpack.c.b16 %v2742, %v2742
      %v2775 = vpack.c.b16 %v2743, %v2743
      %v2776 = vpack.c.b16 %v2744, %v2744
      %v2777 = vpack.c.b16 %v2745, %v2745
      %v2778 = vpack.c.b16 %v2746, %v2746
      %v2779 = vpack.c.b16 %v2747, %v2747
      %v2780 = vpack.c.b16 %v2748, %v2748
      %v2781 = vpack.c.b16 %v2749, %v2749
      %v2782 = vpack.c.b16 %v2750, %v2750
      %v2783 = vpack.c.b16 %v2751, %v2751
      %v2784 = vpack.c.b16 %v2752, %v2752
      %v2785 = vpack.c.b16 %v2753, %v2753
      %v2786 = vpack.c.b16 %v2754, %v2754
      %v2787 = vpack.c.b16 %v2755, %v2755
      %v2788 = vpack.c.b16 %v2756, %v2756
      %v2789 = vpack.c.b16 %v2757, %v2757
      %v2790 = vpack.c.b16 %v2758, %v2758
      %v2791 = vpack.c.b16 %v2759, %v2759
      %v2792 = vpack.c.b16 %v2760, %v2760
      %v2793 = vpack.c.b16 %v2761, %v2761
      %v2794 = vpack.c.b16 %v2762, %v2762
      %v2795 = vpack.c.b16 %v2763, %v2763
      %v2796 = vpack.c.b16 %v2764, %v2764
      %v2797 = vpack.c.b16 %v2765, %v2765
      %v2798 = vpack.c.b16 %v2766, %v2766
      %s2831 = scalar_lea.vmem %s208, 256
      %2832 = vst [vmem:[%s2831] sm:$0xf] %v2767
      %2833 = vst [vmem:[%s2831 + $0x4] sm:$0xf] %v2768
      %2834 = vst [vmem:[%s2831 + $0x8] sm:$0xf] %v2769
      %2835 = vst [vmem:[%s2831 + $0xc] sm:$0xf] %v2770
      %2836 = vst [vmem:[%s2831 + $0x10] sm:$0xf] %v2771
      %2837 = vst [vmem:[%s2831 + $0x14] sm:$0xf] %v2772
      %2838 = vst [vmem:[%s2831 + $0x18] sm:$0xf] %v2773
      %2839 = vst [vmem:[%s2831 + $0x1c] sm:$0xf] %v2774
      %2840 = vst [vmem:[%s2831 + $0x20] sm:$0xf] %v2775
      %2841 = vst [vmem:[%s2831 + $0x24] sm:$0xf] %v2776
      %2842 = vst [vmem:[%s2831 + $0x28] sm:$0xf] %v2777
      %2843 = vst [vmem:[%s2831 + $0x2c] sm:$0xf] %v2778
      %2844 = vst [vmem:[%s2831 + $0x30] sm:$0xf] %v2779
      %2845 = vst [vmem:[%s2831 + $0x34] sm:$0xf] %v2780
      %2846 = vst [vmem:[%s2831 + $0x38] sm:$0xf] %v2781
      %2847 = vst [vmem:[%s2831 + $0x3c] sm:$0xf] %v2782
      %2848 = vst [vmem:[%s2831 + $0x40] sm:$0xf] %v2783
      %2849 = vst [vmem:[%s2831 + $0x44] sm:$0xf] %v2784
      %2850 = vst [vmem:[%s2831 + $0x48] sm:$0xf] %v2785
      %2851 = vst [vmem:[%s2831 + $0x4c] sm:$0xf] %v2786
      %2852 = vst [vmem:[%s2831 + $0x50] sm:$0xf] %v2787
      %2853 = vst [vmem:[%s2831 + $0x54] sm:$0xf] %v2788
      %2854 = vst [vmem:[%s2831 + $0x58] sm:$0xf] %v2789
      %2855 = vst [vmem:[%s2831 + $0x5c] sm:$0xf] %v2790
      %2856 = vst [vmem:[%s2831 + $0x60] sm:$0xf] %v2791
      %2857 = vst [vmem:[%s2831 + $0x64] sm:$0xf] %v2792
      %2858 = vst [vmem:[%s2831 + $0x68] sm:$0xf] %v2793
      %2859 = vst [vmem:[%s2831 + $0x6c] sm:$0xf] %v2794
      %2860 = vst [vmem:[%s2831 + $0x70] sm:$0xf] %v2795
      %2861 = vst [vmem:[%s2831 + $0x74] sm:$0xf] %v2796
      %2862 = vst [vmem:[%s2831 + $0x78] sm:$0xf] %v2797
      %2863 = vst [vmem:[%s2831 + $0x7c] sm:$0xf] %v2798
      %2864 = vrot.lane.b32.xlu0 %v1811, 4
      %v2865 = vpop.permute.xlu0 %2864
      %2866 = vrot.lane.b32.xlu0 %v2425, 8
      %v2867 = vpop.permute.xlu0 %2866
      %v2868 = vunpack.c.l.b16 %v898
      %v2869 = vunpack.c.l.b16 %v901
      %v2870 = vpack.c.b16 %v2869, %v2868
      %2871 = vrot.lane.b32.xlu0 %v2870, 12
      %v2872 = vpop.permute.xlu0 %2871
      %v2875 = vsel %vm1117, %v1084, %v2865
      %v2877 = vsel %vm1166, %v2875, %v2867
      %v2879 = vsel %vm1199, %v2877, %v2872
      %s2880 = scalar_lea.vmem %s2, 24
      %v2881 = vld [vmem:[%s2880] sm:$0xf]
      %v2882 = vld [vmem:[%s2880 + $0x4] sm:$0xf]
      %v2885 = vunpack.c.l.b16 %v2881
      %v2886 = vunpack.c.l.b16 %v2882
      %v2887 = vpack.c.b16 %v2886, %v2885
      %v2889 = vsel %vm1246, %v2879, 0
      %2891 = vmatprep.subr.bf16.mxu0 0
      %2892 = vmatpush1.bf16.msra.mxu0 %v2887
      %2893 = vmatprep.subr.bf16.mxu0 0
      %2894 = vmatpush1.bf16.msra.mxu0 0
      %2895 = vmatprep.subr.bf16.mxu0 0
      %2896 = vmatpush1.bf16.msra.mxu0 0
      %2897 = vmatprep.subr.bf16.mxu0 0
      %2898 = vmatpush1.bf16.msra.mxu0 0
      %2899 = vmatprep.subr.bf16.mxu0 0
      %2900 = vmatpush1.bf16.msra.mxu0 0
      %2901 = vmatprep.subr.bf16.mxu0 0
      %2902 = vmatpush1.bf16.msra.mxu0 0
      %2903 = vmatprep.subr.bf16.mxu0 0
      %2904 = vmatpush1.bf16.msra.mxu0 0
      %2905 = vmatprep.subr.bf16.mxu0 0
      %2906 = vmatpush1.bf16.msra.mxu0 0
      %2907 = vmatprep.subr.bf16.mxu0 0
      %2908 = vmatpush1.bf16.msra.mxu0 0
      %2909 = vmatprep.subr.bf16.mxu0 0
      %2910 = vmatpush1.bf16.msra.mxu0 0
      %2911 = vmatprep.subr.bf16.mxu0 0
      %2912 = vmatpush1.bf16.msra.mxu0 0
      %2913 = vmatprep.subr.bf16.mxu0 0
      %2914 = vmatpush1.bf16.msra.mxu0 0
      %2915 = vmatprep.subr.bf16.mxu0 0
      %2916 = vmatpush1.bf16.msra.mxu0 0
      %2917 = vmatprep.subr.bf16.mxu0 0
      %2918 = vmatpush1.bf16.msra.mxu0 0
      %2919 = vmatprep.subr.bf16.mxu0 0
      %2920 = vmatpush1.bf16.msra.mxu0 0
      %2921 = vmatprep.subr.bf16.mxu0 0
      %2922 = vmatpush1.bf16.msra.mxu0 0
      %2923 = vmatprep.mubr.bf16.mxu0 0
      %2924 = vmatmul.mubr.bf16.gmra.mrb[0].mxu0 %v1967
      %v2925 = vpop.f32.mrb[0].mxu0
      %v2926 = vadd.f32 %v1238, %v2925
      %v2927 = vpop.f32.mrb[0].mxu0
      %v2928 = vpop.f32.mrb[0].mxu0
      %v2929 = vadd.f32 %v1238, %v2928
      %v2930 = vpop.f32.mrb[0].mxu0
      %2931 = vmatprep.mubr.bf16.mxu0 0
      %2932 = vmatmul.mubr.bf16.gmra.mrb[0].mxu0 %v1969
      %v2933 = vpop.f32.mrb[0].mxu0
      %v2934 = vadd.f32 %v1238, %v2933
      %v2935 = vpop.f32.mrb[0].mxu0
      %v2936 = vpop.f32.mrb[0].mxu0
      %v2937 = vadd.f32 %v1238, %v2936
      %v2938 = vpop.f32.mrb[0].mxu0
      %2939 = vmatprep.mubr.bf16.mxu0 0
      %2940 = vmatmul.mubr.bf16.gmra.mrb[0].mxu0 %v1971
      %v2941 = vpop.f32.mrb[0].mxu0
      %v2942 = vadd.f32 %v1238, %v2941
      %v2943 = vpop.f32.mrb[0].mxu0
      %v2944 = vpop.f32.mrb[0].mxu0
      %v2945 = vadd.f32 %v1238, %v2944
      %v2946 = vpop.f32.mrb[0].mxu0
      %2947 = vmatprep.mubr.bf16.mxu0 0
      %2948 = vmatmul.mubr.bf16.gmra.mrb[0].mxu0 %v1973
      %v2949 = vpop.f32.mrb[0].mxu0
      %v2950 = vadd.f32 %v1238, %v2949
      %v2951 = vpop.f32.mrb[0].mxu0
      %v2952 = vpop.f32.mrb[0].mxu0
      %v2953 = vadd.f32 %v1238, %v2952
      %v2954 = vpop.f32.mrb[0].mxu0
      %2955 = vmatprep.mubr.bf16.mxu0 0
      %2956 = vmatmul.mubr.bf16.gmra.mrb[0].mxu0 %v1975
      %v2957 = vpop.f32.mrb[0].mxu0
      %v2958 = vadd.f32 %v1238, %v2957
      %v2959 = vpop.f32.mrb[0].mxu0
      %v2960 = vpop.f32.mrb[0].mxu0
      %v2961 = vadd.f32 %v1238, %v2960
      %v2962 = vpop.f32.mrb[0].mxu0
      %2963 = vmatprep.mubr.bf16.mxu0 0
      %2964 = vmatmul.mubr.bf16.gmra.mrb[0].mxu0 %v1977
      %v2965 = vpop.f32.mrb[0].mxu0
      %v2966 = vadd.f32 %v1238, %v2965
      %v2967 = vpop.f32.mrb[0].mxu0
      %v2968 = vpop.f32.mrb[0].mxu0
      %v2969 = vadd.f32 %v1238, %v2968
      %v2970 = vpop.f32.mrb[0].mxu0
      %2971 = vmatprep.mubr.bf16.mxu0 0
      %2972 = vmatmul.mubr.bf16.gmra.mrb[0].mxu0 %v1979
      %v2973 = vpop.f32.mrb[0].mxu0
      %v2974 = vadd.f32 %v1238, %v2973
      %v2975 = vpop.f32.mrb[0].mxu0
      %v2976 = vpop.f32.mrb[0].mxu0
      %v2977 = vadd.f32 %v1238, %v2976
      %v2978 = vpop.f32.mrb[0].mxu0
      %2979 = vmatprep.mubr.bf16.mxu0 0
      %2980 = vmatmul.mubr.bf16.gmra.mrb[0].mxu0 %v1981
      %v2981 = vpop.f32.mrb[0].mxu0
      %v2982 = vadd.f32 %v1238, %v2981
      %v2983 = vpop.f32.mrb[0].mxu0
      %v2984 = vpop.f32.mrb[0].mxu0
      %v2985 = vadd.f32 %v1238, %v2984
      %v2986 = vpop.f32.mrb[0].mxu0
      %2987 = vmatprep.mubr.bf16.mxu0 0
      %2988 = vmatmul.mubr.bf16.gmra.mrb[0].mxu0 %v1983
      %v2989 = vpop.f32.mrb[0].mxu0
      %v2990 = vadd.f32 %v1238, %v2989
      %v2991 = vpop.f32.mrb[0].mxu0
      %v2992 = vpop.f32.mrb[0].mxu0
      %v2993 = vadd.f32 %v1238, %v2992
      %v2994 = vpop.f32.mrb[0].mxu0
      %2995 = vmatprep.mubr.bf16.mxu0 0
      %2996 = vmatmul.mubr.bf16.gmra.mrb[0].mxu0 %v1985
      %v2997 = vpop.f32.mrb[0].mxu0
      %v2998 = vadd.f32 %v1238, %v2997
      %v2999 = vpop.f32.mrb[0].mxu0
      %v3000 = vpop.f32.mrb[0].mxu0
      %v3001 = vadd.f32 %v1238, %v3000
      %v3002 = vpop.f32.mrb[0].mxu0
      %3003 = vmatprep.mubr.bf16.mxu0 0
      %3004 = vmatmul.mubr.bf16.gmra.mrb[0].mxu0 %v1987
      %v3005 = vpop.f32.mrb[0].mxu0
      %v3006 = vadd.f32 %v1238, %v3005
      %v3007 = vpop.f32.mrb[0].mxu0
      %v3008 = vpop.f32.mrb[0].mxu0
      %v3009 = vadd.f32 %v1238, %v3008
      %v3010 = vpop.f32.mrb[0].mxu0
      %3011 = vmatprep.mubr.bf16.mxu0 0
      %3012 = vmatmul.mubr.bf16.gmra.mrb[0].mxu0 %v1989
      %v3013 = vpop.f32.mrb[0].mxu0
      %v3014 = vadd.f32 %v1238, %v3013
      %v3015 = vpop.f32.mrb[0].mxu0
      %v3016 = vpop.f32.mrb[0].mxu0
      %v3017 = vadd.f32 %v1238, %v3016
      %v3018 = vpop.f32.mrb[0].mxu0
      %3019 = vmatprep.mubr.bf16.mxu0 0
      %3020 = vmatmul.mubr.bf16.gmra.mrb[0].mxu0 %v1991
      %v3021 = vpop.f32.mrb[0].mxu0
      %v3022 = vadd.f32 %v1238, %v3021
      %v3023 = vpop.f32.mrb[0].mxu0
      %v3024 = vpop.f32.mrb[0].mxu0
      %v3025 = vadd.f32 %v1238, %v3024
      %v3026 = vpop.f32.mrb[0].mxu0
      %3027 = vmatprep.mubr.bf16.mxu0 0
      %3028 = vmatmul.mubr.bf16.gmra.mrb[0].mxu0 %v1993
      %v3029 = vpop.f32.mrb[0].mxu0
      %v3030 = vadd.f32 %v1238, %v3029
      %v3031 = vpop.f32.mrb[0].mxu0
      %v3032 = vpop.f32.mrb[0].mxu0
      %v3033 = vadd.f32 %v1238, %v3032
      %v3034 = vpop.f32.mrb[0].mxu0
      %3035 = vmatprep.mubr.bf16.mxu0 0
      %3036 = vmatmul.mubr.bf16.gmra.mrb[0].mxu0 %v1995
      %v3037 = vpop.f32.mrb[0].mxu0
      %v3038 = vadd.f32 %v1238, %v3037
      %v3039 = vpop.f32.mrb[0].mxu0
      %v3040 = vpop.f32.mrb[0].mxu0
      %v3041 = vadd.f32 %v1238, %v3040
      %v3042 = vpop.f32.mrb[0].mxu0
      %3043 = vmatprep.mubr.bf16.mxu0 0
      %3044 = vmatmul.mubr.bf16.gmra.mrb[0].mxu0 %v2889
      %v3045 = vpop.f32.mrb[0].mxu0
      %v3046 = vadd.f32 %v1238, %v3045
      %v3047 = vpop.f32.mrb[0].mxu0
      %v3048 = vpop.f32.mrb[0].mxu0
      %v3049 = vadd.f32 %v1238, %v3048
      %v3050 = vpop.f32.mrb[0].mxu0
      %3051 = vdwg.mxu0
      %vm3052 = vcmp.ge.f32.partialorder %v2926, 0.0
      %vm3053 = vcmp.ge.f32.partialorder %v2929, 0.0
      %vm3054 = vcmp.ge.f32.partialorder %v2934, 0.0
      %vm3055 = vcmp.ge.f32.partialorder %v2937, 0.0
      %vm3056 = vcmp.ge.f32.partialorder %v2942, 0.0
      %vm3057 = vcmp.ge.f32.partialorder %v2945, 0.0
      %vm3058 = vcmp.ge.f32.partialorder %v2950, 0.0
      %vm3059 = vcmp.ge.f32.partialorder %v2953, 0.0
      %vm3060 = vcmp.ge.f32.partialorder %v2958, 0.0
      %vm3061 = vcmp.ge.f32.partialorder %v2961, 0.0
      %vm3062 = vcmp.ge.f32.partialorder %v2966, 0.0
      %vm3063 = vcmp.ge.f32.partialorder %v2969, 0.0
      %vm3064 = vcmp.ge.f32.partialorder %v2974, 0.0
      %vm3065 = vcmp.ge.f32.partialorder %v2977, 0.0
      %vm3066 = vcmp.ge.f32.partialorder %v2982, 0.0
      %vm3067 = vcmp.ge.f32.partialorder %v2985, 0.0
      %vm3068 = vcmp.ge.f32.partialorder %v2990, 0.0
      %vm3069 = vcmp.ge.f32.partialorder %v2993, 0.0
      %vm3070 = vcmp.ge.f32.partialorder %v2998, 0.0
      %vm3071 = vcmp.ge.f32.partialorder %v3001, 0.0
      %vm3072 = vcmp.ge.f32.partialorder %v3006, 0.0
      %vm3073 = vcmp.ge.f32.partialorder %v3009, 0.0
      %vm3074 = vcmp.ge.f32.partialorder %v3014, 0.0
      %vm3075 = vcmp.ge.f32.partialorder %v3017, 0.0
      %vm3076 = vcmp.ge.f32.partialorder %v3022, 0.0
      %vm3077 = vcmp.ge.f32.partialorder %v3025, 0.0
      %vm3078 = vcmp.ge.f32.partialorder %v3030, 0.0
      %vm3079 = vcmp.ge.f32.partialorder %v3033, 0.0
      %vm3080 = vcmp.ge.f32.partialorder %v3038, 0.0
      %vm3081 = vcmp.ge.f32.partialorder %v3041, 0.0
      %vm3082 = vcmp.ge.f32.partialorder %v3046, 0.0
      %vm3083 = vcmp.ge.f32.partialorder %v3049, 0.0
      %v3084 = vmul.f32 %v1472, %v2926
      %v3085 = vmul.f32 %v1472, %v2929
      %v3086 = vmul.f32 %v1472, %v2934
      %v3087 = vmul.f32 %v1472, %v2937
      %v3088 = vmul.f32 %v1472, %v2942
      %v3089 = vmul.f32 %v1472, %v2945
      %v3090 = vmul.f32 %v1472, %v2950
      %v3091 = vmul.f32 %v1472, %v2953
      %v3092 = vmul.f32 %v1472, %v2958
      %v3093 = vmul.f32 %v1472, %v2961
      %v3094 = vmul.f32 %v1472, %v2966
      %v3095 = vmul.f32 %v1472, %v2969
      %v3096 = vmul.f32 %v1472, %v2974
      %v3097 = vmul.f32 %v1472, %v2977
      %v3098 = vmul.f32 %v1472, %v2982
      %v3099 = vmul.f32 %v1472, %v2985
      %v3100 = vmul.f32 %v1472, %v2990
      %v3101 = vmul.f32 %v1472, %v2993
      %v3102 = vmul.f32 %v1472, %v2998
      %v3103 = vmul.f32 %v1472, %v3001
      %v3104 = vmul.f32 %v1472, %v3006
      %v3105 = vmul.f32 %v1472, %v3009
      %v3106 = vmul.f32 %v1472, %v3014
      %v3107 = vmul.f32 %v1472, %v3017
      %v3108 = vmul.f32 %v1472, %v3022
      %v3109 = vmul.f32 %v1472, %v3025
      %v3110 = vmul.f32 %v1472, %v3030
      %v3111 = vmul.f32 %v1472, %v3033
      %v3112 = vmul.f32 %v1472, %v3038
      %v3113 = vmul.f32 %v1472, %v3041
      %v3114 = vmul.f32 %v1472, %v3046
      %v3115 = vmul.f32 %v1472, %v3049
      %v3116 = vsel %vm3052, %v2926, %v3084
      %v3117 = vsel %vm3053, %v2929, %v3085
      %v3118 = vsel %vm3054, %v2934, %v3086
      %v3119 = vsel %vm3055, %v2937, %v3087
      %v3120 = vsel %vm3056, %v2942, %v3088
      %v3121 = vsel %vm3057, %v2945, %v3089
      %v3122 = vsel %vm3058, %v2950, %v3090
      %v3123 = vsel %vm3059, %v2953, %v3091
      %v3124 = vsel %vm3060, %v2958, %v3092
      %v3125 = vsel %vm3061, %v2961, %v3093
      %v3126 = vsel %vm3062, %v2966, %v3094
      %v3127 = vsel %vm3063, %v2969, %v3095
      %v3128 = vsel %vm3064, %v2974, %v3096
      %v3129 = vsel %vm3065, %v2977, %v3097
      %v3130 = vsel %vm3066, %v2982, %v3098
      %v3131 = vsel %vm3067, %v2985, %v3099
      %v3132 = vsel %vm3068, %v2990, %v3100
      %v3133 = vsel %vm3069, %v2993, %v3101
      %v3134 = vsel %vm3070, %v2998, %v3102
      %v3135 = vsel %vm3071, %v3001, %v3103
      %v3136 = vsel %vm3072, %v3006, %v3104
      %v3137 = vsel %vm3073, %v3009, %v3105
      %v3138 = vsel %vm3074, %v3014, %v3106
      %v3139 = vsel %vm3075, %v3017, %v3107
      %v3140 = vsel %vm3076, %v3022, %v3108
      %v3141 = vsel %vm3077, %v3025, %v3109
      %v3142 = vsel %vm3078, %v3030, %v3110
      %v3143 = vsel %vm3079, %v3033, %v3111
      %v3144 = vsel %vm3080, %v3038, %v3112
      %v3145 = vsel %vm3081, %v3041, %v3113
      %v3146 = vsel %vm3082, %v3046, %v3114
      %v3147 = vsel %vm3083, %v3049, %v3115
      %v3148 = vpack.c.bf16 %v3117, %v3116
      %v3149 = vpack.c.bf16 %v3119, %v3118
      %v3150 = vpack.c.bf16 %v3121, %v3120
      %v3151 = vpack.c.bf16 %v3123, %v3122
      %v3152 = vpack.c.bf16 %v3125, %v3124
      %v3153 = vpack.c.bf16 %v3127, %v3126
      %v3154 = vpack.c.bf16 %v3129, %v3128
      %v3155 = vpack.c.bf16 %v3131, %v3130
      %v3156 = vpack.c.bf16 %v3133, %v3132
      %v3157 = vpack.c.bf16 %v3135, %v3134
      %v3158 = vpack.c.bf16 %v3137, %v3136
      %v3159 = vpack.c.bf16 %v3139, %v3138
      %v3160 = vpack.c.bf16 %v3141, %v3140
      %v3161 = vpack.c.bf16 %v3143, %v3142
      %v3162 = vpack.c.bf16 %v3145, %v3144
      %v3163 = vpack.c.bf16 %v3147, %v3146
      %v3180 = vunpack.c.l.b16 %v3148
      %v3181 = vunpack.c.h.b16 %v3148
      %v3182 = vunpack.c.l.b16 %v3149
      %v3183 = vunpack.c.h.b16 %v3149
      %v3184 = vunpack.c.l.b16 %v3150
      %v3185 = vunpack.c.h.b16 %v3150
      %v3186 = vunpack.c.l.b16 %v3151
      %v3187 = vunpack.c.h.b16 %v3151
      %v3188 = vunpack.c.l.b16 %v3152
      %v3189 = vunpack.c.h.b16 %v3152
      %v3190 = vunpack.c.l.b16 %v3153
      %v3191 = vunpack.c.h.b16 %v3153
      %v3192 = vunpack.c.l.b16 %v3154
      %v3193 = vunpack.c.h.b16 %v3154
      %v3194 = vunpack.c.l.b16 %v3155
      %v3195 = vunpack.c.h.b16 %v3155
      %v3196 = vunpack.c.l.b16 %v3156
      %v3197 = vunpack.c.h.b16 %v3156
      %v3198 = vunpack.c.l.b16 %v3157
      %v3199 = vunpack.c.h.b16 %v3157
      %v3200 = vunpack.c.l.b16 %v3158
      %v3201 = vunpack.c.h.b16 %v3158
      %v3202 = vunpack.c.l.b16 %v3159
      %v3203 = vunpack.c.h.b16 %v3159
      %v3204 = vunpack.c.l.b16 %v3160
      %v3205 = vunpack.c.h.b16 %v3160
      %v3206 = vunpack.c.l.b16 %v3161
      %v3207 = vunpack.c.h.b16 %v3161
      %v3208 = vunpack.c.l.b16 %v3162
      %v3209 = vunpack.c.h.b16 %v3162
      %v3210 = vunpack.c.l.b16 %v3163
      %v3211 = vunpack.c.h.b16 %v3163
      %v3212 = vpack.c.b16 %v3180, %v3180
      %v3213 = vpack.c.b16 %v3181, %v3181
      %v3214 = vpack.c.b16 %v3182, %v3182
      %v3215 = vpack.c.b16 %v3183, %v3183
      %v3216 = vpack.c.b16 %v3184, %v3184
      %v3217 = vpack.c.b16 %v3185, %v3185
      %v3218 = vpack.c.b16 %v3186, %v3186
      %v3219 = vpack.c.b16 %v3187, %v3187
      %v3220 = vpack.c.b16 %v3188, %v3188
      %v3221 = vpack.c.b16 %v3189, %v3189
      %v3222 = vpack.c.b16 %v3190, %v3190
      %v3223 = vpack.c.b16 %v3191, %v3191
      %v3224 = vpack.c.b16 %v3192, %v3192
      %v3225 = vpack.c.b16 %v3193, %v3193
      %v3226 = vpack.c.b16 %v3194, %v3194
      %v3227 = vpack.c.b16 %v3195, %v3195
      %v3228 = vpack.c.b16 %v3196, %v3196
      %v3229 = vpack.c.b16 %v3197, %v3197
      %v3230 = vpack.c.b16 %v3198, %v3198
      %v3231 = vpack.c.b16 %v3199, %v3199
      %v3232 = vpack.c.b16 %v3200, %v3200
      %v3233 = vpack.c.b16 %v3201, %v3201
      %v3234 = vpack.c.b16 %v3202, %v3202
      %v3235 = vpack.c.b16 %v3203, %v3203
      %v3236 = vpack.c.b16 %v3204, %v3204
      %v3237 = vpack.c.b16 %v3205, %v3205
      %v3238 = vpack.c.b16 %v3206, %v3206
      %v3239 = vpack.c.b16 %v3207, %v3207
      %v3240 = vpack.c.b16 %v3208, %v3208
      %v3241 = vpack.c.b16 %v3209, %v3209
      %v3242 = vpack.c.b16 %v3210, %v3210
      %v3243 = vpack.c.b16 %v3211, %v3211
      %s3276 = scalar_lea.vmem %s208, 384
      %3277 = vst [vmem:[%s3276] sm:$0xf] %v3212
      %3278 = vst [vmem:[%s3276 + $0x4] sm:$0xf] %v3213
      %3279 = vst [vmem:[%s3276 + $0x8] sm:$0xf] %v3214
      %3280 = vst [vmem:[%s3276 + $0xc] sm:$0xf] %v3215
      %3281 = vst [vmem:[%s3276 + $0x10] sm:$0xf] %v3216
      %3282 = vst [vmem:[%s3276 + $0x14] sm:$0xf] %v3217
      %3283 = vst [vmem:[%s3276 + $0x18] sm:$0xf] %v3218
      %3284 = vst [vmem:[%s3276 + $0x1c] sm:$0xf] %v3219
      %3285 = vst [vmem:[%s3276 + $0x20] sm:$0xf] %v3220
      %3286 = vst [vmem:[%s3276 + $0x24] sm:$0xf] %v3221
      %3287 = vst [vmem:[%s3276 + $0x28] sm:$0xf] %v3222
      %3288 = vst [vmem:[%s3276 + $0x2c] sm:$0xf] %v3223
      %3289 = vst [vmem:[%s3276 + $0x30] sm:$0xf] %v3224
      %3290 = vst [vmem:[%s3276 + $0x34] sm:$0xf] %v3225
      %3291 = vst [vmem:[%s3276 + $0x38] sm:$0xf] %v3226
      %3292 = vst [vmem:[%s3276 + $0x3c] sm:$0xf] %v3227
      %3293 = vst [vmem:[%s3276 + $0x40] sm:$0xf] %v3228
      %3294 = vst [vmem:[%s3276 + $0x44] sm:$0xf] %v3229
      %3295 = vst [vmem:[%s3276 + $0x48] sm:$0xf] %v3230
      %3296 = vst [vmem:[%s3276 + $0x4c] sm:$0xf] %v3231
      %3297 = vst [vmem:[%s3276 + $0x50] sm:$0xf] %v3232
      %3298 = vst [vmem:[%s3276 + $0x54] sm:$0xf] %v3233
      %3299 = vst [vmem:[%s3276 + $0x58] sm:$0xf] %v3234
      %3300 = vst [vmem:[%s3276 + $0x5c] sm:$0xf] %v3235
      %3301 = vst [vmem:[%s3276 + $0x60] sm:$0xf] %v3236
      %3302 = vst [vmem:[%s3276 + $0x64] sm:$0xf] %v3237
      %3303 = vst [vmem:[%s3276 + $0x68] sm:$0xf] %v3238
      %3304 = vst [vmem:[%s3276 + $0x6c] sm:$0xf] %v3239
      %3305 = vst [vmem:[%s3276 + $0x70] sm:$0xf] %v3240
      %3306 = vst [vmem:[%s3276 + $0x74] sm:$0xf] %v3241
      %3307 = vst [vmem:[%s3276 + $0x78] sm:$0xf] %v3242
      %3308 = vst [vmem:[%s3276 + $0x7c] sm:$0xf] %v3243
      %p3309 = scmp.lt.s32.totalorder %s20, 1
      %s3310 = scalar_select %p3309, %s20, 1
      %p3311 = scmp.lt.s32.totalorder %s21, 0
      %s3312 = scalar_select %p3311, %s21, 0
      %s3313 = smul.addr %s3312, 128
      %s3314 = smul.addr %s3310, 128
      %s3315 = sadd.s32 %s3313, %s3314
      %s3316 = smul.addr %s3315, 4
      %s3317 = scalar_lea.vmem %s4, %s3316
      // Predicated region
      $region33: #{deconv_block_forward.1} parent=31 // pred_check
        %p3318 = pneg %p118
      $region34: #{deconv_block_forward.1} parent=31 // pred_check_branch
        %3320 = sbr.rel (%p3318) target = $region36
      $region35: #{deconv_block_forward.1} parent=31 // pred_region
        _
      $region36: #{deconv_block_forward.1} parent=31 // pred_fallthru
        _
    $region32: #{deconv_block_forward.1} parent=5 // pred_fallthru
      _
    %p3321 = scmp.le.s32.totalorder 2, %s11
    // Predicated region
    $region37: #{deconv_block_forward.1} parent=5 // pred_check
      %p3322 = pneg %p3321
    $region38: #{deconv_block_forward.1} parent=5 // pred_check_branch
      %3324 = sbr.rel (%p3322) target = $region40
    $region39: #{deconv_block_forward.1} parent=5 // pred_region
      %s3325 = ssub.s32 %s11, 2
      // Predicated region
      $region41: #{deconv_block_forward.1} parent=39 // pred_check
        %p3326 = pneg %p124
      $region42: #{deconv_block_forward.1} parent=39 // pred_check_branch
        %3328 = sbr.rel (%p3326) target = $region44
      $region43: #{deconv_block_forward.1} parent=39 // pred_region
        %p3329 = scmp.lt.s32.totalorder %s22, 1
        %s3330 = scalar_select %p3329, %s22, 1
        %p3331 = scmp.lt.s32.totalorder %s23, 0
        %s3332 = scalar_select %p3331, %s23, 0
        %s3333 = smul.addr %s3332, 128
        %s3334 = smul.addr %s3330, 128
        %s3335 = sadd.s32 %s3333, %s3334
        %s3336 = smul.addr %s3335, 4
        %s3337 = scalar_lea.vmem %s4, %s3336
      $region44: #{deconv_block_forward.1} parent=39 // pred_fallthru
        _
    $region40: #{deconv_block_forward.1} parent=5 // pred_fallthru
      _
  $region6: #{deconv_block_forward.1} parent=0 // loop_footer
    %s15 = sadd.s32 1, %s11
  $region7: #{deconv_block_forward.1} parent=0 // loop_footer_branch
    %10 = sbr.rel target = $region3
  $region8: #{deconv_block_forward.1} parent=0 // loop_exit
    _

</llo_original>
